<compile_context>
chip_gen: v5e
topology: v5e:2x2
jax: 0.10.0
libtpu: 0.0.40
codegen_flags: <defaults>
</compile_context>

<pallas_src>
import functools
import math

import jax
import jax.numpy as jnp
import numpy as np
from jax.experimental import pallas as pl
from jax.experimental.pallas import tpu as pltpu

VMEM_LIMIT = 32 * 1024 * 1024  # explicit scoped-VMEM budget, safe on v5e/v6e/v7x


def _cparams(*sem):
    return pltpu.CompilerParams(dimension_semantics=sem,
                                vmem_limit_bytes=VMEM_LIMIT)


# ---------------------------------------------------------------------------
# 1x1 QKV projection: (M, Cin) @ (Cin, C) x3 + bias, bf16 operands, f32 accum
# ---------------------------------------------------------------------------
def _qkv_kernel(x_ref, wq_ref, wk_ref, wv_ref, bq_ref, bk_ref, bv_ref,
                q_ref, k_ref, v_ref):
    x = x_ref[...]                                              # (TM, Cin) bf16
    q_ref[...] = (jnp.dot(x, wq_ref[...], preferred_element_type=jnp.float32)
                  + bq_ref[...]).astype(q_ref.dtype)
    k_ref[...] = (jnp.dot(x, wk_ref[...], preferred_element_type=jnp.float32)
                  + bk_ref[...]).astype(k_ref.dtype)
    v_ref[...] = (jnp.dot(x, wv_ref[...], preferred_element_type=jnp.float32)
                  + bv_ref[...]).astype(v_ref.dtype)


def qkv_pointwise(x_flat, wq, wk, wv, bq, bk, bv, tile_m=512):
    """x_flat: (M, Cin). Returns q, k, v each (M, C) in bfloat16."""
    M, Cin = x_flat.shape
    C = wq.shape[1]
    Mp = ((M + tile_m - 1) // tile_m) * tile_m
    x_flat = x_flat.astype(jnp.bfloat16)
    if Mp != M:
        x_flat = jnp.pad(x_flat, ((0, Mp - M), (0, 0)))

    w_args = [w.astype(jnp.bfloat16) for w in (wq, wk, wv)]
    b_args = [b.reshape(1, C).astype(jnp.float32) for b in (bq, bk, bv)]

    x_spec = pl.BlockSpec((tile_m, Cin), lambda i: (i, 0))
    w_spec = pl.BlockSpec((Cin, C), lambda i: (0, 0))
    b_spec = pl.BlockSpec((1, C), lambda i: (0, 0))
    o_spec = pl.BlockSpec((tile_m, C), lambda i: (i, 0))
    o_shape = jax.ShapeDtypeStruct((Mp, C), jnp.bfloat16)

    flops = 2 * Mp * Cin * C * 3
    bytes_acc = Mp * Cin * 2 + 3 * (Cin * C * 2 + C * 4 + Mp * C * 2)

    q, k, v = pl.pallas_call(
        _qkv_kernel,
        out_shape=(o_shape, o_shape, o_shape),
        grid=(Mp // tile_m,),
        in_specs=[x_spec, w_spec, w_spec, w_spec, b_spec, b_spec, b_spec],
        out_specs=(o_spec, o_spec, o_spec),
        compiler_params=_cparams("parallel"),
        cost_estimate=pl.CostEstimate(flops=flops, transcendentals=0,
                                      bytes_accessed=bytes_acc),
    )(x_flat, *w_args, *b_args)
    if Mp != M:
        q, k, v = q[:M], k[:M], v[:M]
    return q, k, v


# ---------------------------------------------------------------------------
# Attention: flash-style KV tiling with online softmax (per batch element)
# ---------------------------------------------------------------------------
def _attention_kernel(q_ref, k_ref, v_ref, o_ref, m_ref, l_ref, acc_ref):
    kv = pl.program_id(1)

    @pl.when(kv == 0)
    def _():
        m_ref[...] = jnp.full(m_ref.shape, -jnp.inf, jnp.float32)
        l_ref[...] = jnp.zeros(l_ref.shape, jnp.float32)
        acc_ref[...] = jnp.zeros(acc_ref.shape, jnp.float32)

    q = q_ref[...]                                        # (N, D) bf16, pre-scaled
    k = k_ref[...]                                        # (TKV, D) bf16
    s = jax.lax.dot_general(q, k, (((1,), (1,)), ((), ())),
                            preferred_element_type=jnp.float32)   # (N, TKV) f32

    m_prev = m_ref[...]
    m_new = jnp.maximum(m_prev, jnp.max(s, axis=-1, keepdims=True))
    alpha = jnp.exp(m_prev - m_new)
    p = jnp.exp(s - m_new)
    l_ref[...] = alpha * l_ref[...] + jnp.sum(p, axis=-1, keepdims=True)
    acc_ref[...] = alpha * acc_ref[...] + jnp.dot(
        p.astype(v_ref.dtype), v_ref[...], preferred_element_type=jnp.float32)
    m_ref[...] = m_new

    @pl.when(kv == pl.num_programs(1) - 1)
    def _():
        inv_l = pl.reciprocal(l_ref[...], approx=True)
        o_ref[...] = (acc_ref[...] * inv_l).astype(o_ref.dtype)


def _pick_kv_tile(n):
    for t in (1024, 512, 256, 128):
        if n % t == 0:
            return t
    return n


def pallas_attention(q, k, v):
    """q, k, v: (b, N, D). Returns softmax(q k^T / sqrt(D)) v in bfloat16."""
    b, N, D = q.shape
    scale = 1.0 / math.sqrt(D)
    # Fold the 1/sqrt(D) scale into q (N*D mults, fuses with the cast) instead
    # of scaling the (N, N) score matrix inside the kernel.
    q = q.astype(jnp.bfloat16) * scale
    k = k.astype(jnp.bfloat16)
    v = v.astype(jnp.bfloat16)

    tkv = _pick_kv_tile(N)
    n_kv = N // tkv

    q_spec = pl.BlockSpec((None, N, D), lambda i, j: (i, 0, 0))
    kv_spec = pl.BlockSpec((None, tkv, D), lambda i, j: (i, j, 0))
    o_spec = pl.BlockSpec((None, N, D), lambda i, j: (i, 0, 0))

    flops = 4 * b * N * N * D
    bytes_acc = 4 * b * N * D * 2

    # TODO(synk): also tile the query/accumulator rows for extremely large N
    # (very long clips); KV tiling alone already bounds the score matrix.
    return pl.pallas_call(
        _attention_kernel,
        out_shape=jax.ShapeDtypeStruct((b, N, D), jnp.bfloat16),
        grid=(b, n_kv),
        in_specs=[q_spec, kv_spec, kv_spec],
        out_specs=o_spec,
        scratch_shapes=[
            pltpu.VMEM((N, 1), jnp.float32),
            pltpu.VMEM((N, 1), jnp.float32),
            pltpu.VMEM((N, D), jnp.float32),
        ],
        compiler_params=_cparams("parallel", "arbitrary"),
        cost_estimate=pl.CostEstimate(flops=flops, transcendentals=b * N * N,
                                      bytes_accessed=bytes_acc),
    )(q, k, v)


# ---------------------------------------------------------------------------
# 3x3 conv + ReLU: shift-and-matmul on the flattened padded image
# ---------------------------------------------------------------------------
def _conv3x3_relu_kernel(x_ref, w_ref, b_ref, o_ref, *, W):
    # x_ref: (P, Cin) bf16  -- flattened zero-padded image, P=(H+2)*(W+2)+2
    # w_ref: (9*Cin, Cout) bf16 -- taps stacked (ky, kx, ci)
    # b_ref: (1, Cout) f32
    # o_ref: (H*(W+2), Cout) f32 -- rows y*(W+2)+x; cols x>=W are junk (sliced
    #        off in the wrapper)
    HW2, Cout = o_ref.shape
    Cin = x_ref.shape[-1]
    acc = jnp.zeros((HW2, Cout), jnp.float32)
    for ky in range(3):
        for kx in range(3):
            start = ky * (W + 2) + kx
            tap = ky * 3 + kx
            acc = acc + jnp.dot(x_ref[start:start + HW2, :],
                                w_ref[tap * Cin:(tap + 1) * Cin, :],
                                preferred_element_type=jnp.float32)
    o_ref[...] = jnp.maximum(acc + b_ref[...], 0.0)   # bias added once


def pallas_conv3x3_relu(x_nhwc, w, bias):
    """3x3 'same' conv (+bias, ReLU). x_nhwc: (N, H, W, C); w: (3,3,Cin,Cout)."""
    N, H, W, C = x_nhwc.shape
    Cout = w.shape[-1]
    HW2 = H * (W + 2)
    P = (H + 2) * (W + 2) + 2            # +2 so the last tap slice is in-bounds

    xp = jnp.pad(x_nhwc.astype(jnp.bfloat16), ((0, 0), (1, 1), (1, 1), (0, 0)))
    x_flat = xp.reshape(N, (H + 2) * (W + 2), C)
    x_flat = jnp.pad(x_flat, ((0, 0), (0, 2), (0, 0)))
    w_stack = w.reshape(9 * C, Cout).astype(jnp.bfloat16)
    bias2 = bias.reshape(1, Cout).astype(jnp.float32)

    flops = 2 * N * HW2 * C * Cout * 9
    bytes_acc = N * (P * C * 2 + HW2 * Cout * 4) + 9 * C * Cout * 2 + Cout * 4

    # TODO(synk): for very high-resolution frames, tile the grid over row bands
    # (with a 2-row halo) instead of whole images to keep per-step VMEM bounded.
    out_flat = pl.pallas_call(
        functools.partial(_conv3x3_relu_kernel, W=W),
        out_shape=jax.ShapeDtypeStruct((N, HW2, Cout), jnp.float32),
        grid=(N,),
        in_specs=[
            pl.BlockSpec((None, P, C), lambda n: (n, 0, 0)),
            pl.BlockSpec((9 * C, Cout), lambda n: (0, 0)),
            pl.BlockSpec((1, Cout), lambda n: (0, 0)),
        ],
        out_specs=pl.BlockSpec((None, HW2, Cout), lambda n: (n, 0, 0)),
        compiler_params=_cparams("parallel"),
        cost_estimate=pl.CostEstimate(flops=flops, transcendentals=0,
                                      bytes_accessed=bytes_acc),
    )(x_flat, w_stack, bias2)

    return out_flat.reshape(N, H, W + 2, Cout)[:, :, :W, :]


# ---------------------------------------------------------------------------
# MultiHead forward (channels-last glue, hot paths in Pallas kernels)
# ---------------------------------------------------------------------------
def calculate_patchsize(h, w, l=4):
    divval = 2 ** (l - 1)
    h_min = int(math.ceil(h / divval))
    w_min = int(math.ceil(w / divval))
    ps = [(h_min * (2 ** i), w_min * (2 ** i)) for i in range(l)]
    return ps[::-1], (divval * h_min, divval * w_min)


def multihead_forward(x, params, b, c):
    bt, _, h0, w0 = x.shape
    patchsizes, hw = calculate_patchsize(h0, w0, 4)

    hpad1 = hpad2 = wpad1 = wpad2 = 0
    if hw[0] > h0 or hw[1] > w0:
        hpad1 = (hw[0] - h0) // 2
        hpad2 = hw[0] - h0 - hpad1
        wpad1 = (hw[1] - w0) // 2
        wpad2 = hw[1] - w0 - wpad1
        x = jnp.pad(x, ((0, 0), (0, 0), (hpad1, hpad2), (wpad1, wpad2)),
                    mode="reflect")

    bt, _, h, w = x.shape
    t = bt // b
    d_k = c // len(patchsizes)

    # single NCHW -> NHWC transpose; everything downstream stays channels-last
    x_flat = jnp.transpose(x, (0, 2, 3, 1)).reshape(bt * h * w, c)
    q_f, k_f, v_f = qkv_pointwise(x_flat,
                                  params["wq"], params["wk"], params["wv"],
                                  params["bq"], params["bk"], params["bv"])
    q_n = q_f.reshape(bt, h, w, c)       # NHWC, no transpose needed
    k_n = k_f.reshape(bt, h, w, c)
    v_n = v_f.reshape(bt, h, w, c)

    outs = []
    for s, (height, width) in enumerate(patchsizes):
        out_h, out_w = h // height, w // width
        N = t * out_h * out_w
        D = d_k * height * width

        def regroup(a, s=s, height=height, width=width,
                    out_h=out_h, out_w=out_w, N=N, D=D):
            ch = a[..., s * d_k:(s + 1) * d_k]                   # (bt, h, w, d_k)
            ch = ch.reshape(b, t, out_h, height, out_w, width, d_k)
            ch = jnp.transpose(ch, (0, 1, 2, 4, 6, 3, 5))
            return ch.reshape(b, N, D)

        y = pallas_attention(regroup(q_n), regroup(k_n), regroup(v_n))
        y = y.reshape(b, t, out_h, out_w, d_k, height, width)
        y = jnp.transpose(y, (0, 1, 2, 5, 3, 6, 4)).reshape(bt, h, w, d_k)
        outs.append(y)

    out = jnp.concatenate(outs, axis=-1)                         # (bt, h, w, c)

    if hpad1 or hpad2 or wpad1 or wpad2:
        if (hpad1 or hpad2) and (wpad1 or wpad2):
            out = out[:, hpad1:h - hpad2, wpad1:w - wpad2, :]
        elif hpad1 or hpad2:
            out = out[:, hpad1:h - hpad2, :, :]
        else:
            out = out[:, :, wpad1:w - wpad2, :]

    y = pallas_conv3x3_relu(out, params["w3"], params["b3"])     # NHWC, f32
    return jnp.transpose(y, (0, 3, 1, 2))                        # NCHW like torch


# ---------------------------------------------------------------------------
# Pure-JAX fp32 reference (mirrors the PyTorch module, NCHW throughout)
# ---------------------------------------------------------------------------
def ref_forward(x, params, b, c):
    bt, _, h0, w0 = x.shape
    patchsizes, hw = calculate_patchsize(h0, w0, 4)

    hpad1 = hpad2 = wpad1 = wpad2 = 0
    if hw[0] > h0 or hw[1] > w0:
        hpad1 = (hw[0] - h0) // 2
        hpad2 = hw[0] - h0 - hpad1
        wpad1 = (hw[1] - w0) // 2
        wpad2 = hw[1] - w0 - wpad1
        x = jnp.pad(x, ((0, 0), (0, 0), (hpad1, hpad2), (wpad1, wpad2)),
                    mode="reflect")

    bt, _, h, w = x.shape
    t = bt // b
    d_k = c // len(patchsizes)

    def conv1x1(xi, wmat, bias):
        return jnp.einsum("bchw,cd->bdhw", xi, wmat) + bias[None, :, None, None]

    q = conv1x1(x, params["wq"], params["bq"])
    k = conv1x1(x, params["wk"], params["bk"])
    v = conv1x1(x, params["wv"], params["bv"])

    outs = []
    for s, (height, width) in enumerate(patchsizes):
        out_h, out_w = h // height, w // width

        def rg(a, s=s, height=height, width=width, out_h=out_h, out_w=out_w):
            ch = a[:, s * d_k:(s + 1) * d_k]
            ch = ch.reshape(b, t, d_k, out_h, height, out_w, width)
            ch = jnp.transpose(ch, (0, 1, 3, 5, 2, 4, 6))
            return ch.reshape(b, t * out_h * out_w, d_k * height * width)

        qq, kk, vv = rg(q), rg(k), rg(v)
        scores = jnp.einsum("bnd,bmd->bnm", qq, kk) / math.sqrt(qq.shape[-1])
        p = jax.nn.softmax(scores, axis=-1)
        y = jnp.einsum("bnm,bmd->bnd", p, vv)
        y = y.reshape(b, t, out_h, out_w, d_k, height, width)
        y = jnp.transpose(y, (0, 1, 4, 2, 5, 3, 6)).reshape(bt, d_k, h, w)
        outs.append(y)

    out = jnp.concatenate(outs, axis=1)

    if hpad1 or hpad2 or wpad1 or wpad2:
        if (hpad1 or hpad2) and (wpad1 or wpad2):
            out = out[:, :, hpad1:h - hpad2, wpad1:w - wpad2]
        elif hpad1 or hpad2:
            out = out[:, :, hpad1:h - hpad2, :]
        else:
            out = out[:, :, :, wpad1:w - wpad2]

    yc = jax.lax.conv_general_dilated(
        out, params["w3"], (1, 1), ((1, 1), (1, 1)),
        dimension_numbers=("NCHW", "HWIO", "NCHW"))
    yc = yc + params["b3"][None, :, None, None]
    return jnp.maximum(yc, 0.0)


# ---------------------------------------------------------------------------
# Deterministic parameter init (mimics nn.Conv2d default uniform init)
# ---------------------------------------------------------------------------
def init_params(key, c):
    ks = jax.random.split(key, 8)
    b1 = 1.0 / math.sqrt(c)        # 1x1 convs: fan_in = c
    b3 = 1.0 / math.sqrt(c * 9)    # 3x3 conv:  fan_in = 9c
    u = lambda k, shape, bound: jax.random.uniform(
        k, shape, jnp.float32, -bound, bound)
    return {
        # 1x1 conv weights stored transposed: (Cin, Cout)
        "wq": u(ks[0], (c, c), b1), "bq": u(ks[1], (c,), b1),
        "wk": u(ks[2], (c, c), b1), "bk": u(ks[3], (c,), b1),
        "wv": u(ks[4], (c, c), b1), "bv": u(ks[5], (c,), b1),
        # 3x3 conv weight stored HWIO: (3, 3, Cin, Cout)
        "w3": u(ks[6], (3, 3, c, c), b3), "b3": u(ks[7], (c,), b3),
    }


if __name__ == "__main__":
    # small shapes: b=2 clips, t=2 frames, d_model=8 channels, 16x16 spatial
    # (h, w divisible by 8 so the reflect-pad branch is a no-op, as in the ref)
    b, t, c, h, w = 2, 2, 8, 16, 16
    bt = b * t

    key = jax.random.PRNGKey(0)
    kx, kp = jax.random.split(key)
    x = jax.random.normal(kx, (bt, c, h, w), jnp.float32)
    params = init_params(kp, c)

    out = multihead_forward(x, params, b, c)
    out = jax.block_until_ready(out)
    assert out.shape == (bt, c, h, w), out.shape

    ref = ref_forward(x, params, b, c)
    # bf16 matmul operands (f32 accumulation) -> bf16-level tolerance vs f32 ref
    np.testing.assert_allclose(np.asarray(out), np.asarray(ref),
                               rtol=3e-2, atol=3e-2)

    print("KERNEL_OK")
</pallas_src>

<mosaic_0001>
module attributes {stable_mosaic.version = 11 : i64} {
  func.func @_qkv_kernel(%arg0: i32, %arg1: memref<512x8xbf16, #tpu.memory_space<vmem>>, %arg2: memref<8x8xbf16, #tpu.memory_space<vmem>>, %arg3: memref<8x8xbf16, #tpu.memory_space<vmem>>, %arg4: memref<8x8xbf16, #tpu.memory_space<vmem>>, %arg5: memref<1x8xf32, #tpu.memory_space<vmem>>, %arg6: memref<1x8xf32, #tpu.memory_space<vmem>>, %arg7: memref<1x8xf32, #tpu.memory_space<vmem>>, %arg8: memref<512x8xbf16, #tpu.memory_space<vmem>>, %arg9: memref<512x8xbf16, #tpu.memory_space<vmem>>, %arg10: memref<512x8xbf16, #tpu.memory_space<vmem>>) attributes {dimension_semantics = [#tpu.dimension_semantics<parallel>], iteration_bounds = array<i64: 2>, scalar_prefetch = 0 : i64, scratch_operands = 0 : i64, tpu.core_type = #tpu.core_type<tc>, window_params = [{transform_indices = @transform_0, window_bounds = array<i64: 512, 8>}, {pipeline_mode = #tpu.pipeline_mode<synchronous>, transform_indices = @transform_1, window_bounds = array<i64: 8, 8>}, {pipeline_mode = #tpu.pipeline_mode<synchronous>, transform_indices = @transform_2, window_bounds = array<i64: 8, 8>}, {pipeline_mode = #tpu.pipeline_mode<synchronous>, transform_indices = @transform_3, window_bounds = array<i64: 8, 8>}, {pipeline_mode = #tpu.pipeline_mode<synchronous>, transform_indices = @transform_4, window_bounds = array<i64: 1, 8>}, {pipeline_mode = #tpu.pipeline_mode<synchronous>, transform_indices = @transform_5, window_bounds = array<i64: 1, 8>}, {pipeline_mode = #tpu.pipeline_mode<synchronous>, transform_indices = @transform_6, window_bounds = array<i64: 1, 8>}, {transform_indices = @transform_7, window_bounds = array<i64: 512, 8>}, {transform_indices = @transform_8, window_bounds = array<i64: 512, 8>}, {transform_indices = @transform_9, window_bounds = array<i64: 512, 8>}]} {
    %c0 = arith.constant 0 : index
    %c0_0 = arith.constant 0 : index
    %0 = vector.load %arg1[%c0, %c0_0] : memref<512x8xbf16, #tpu.memory_space<vmem>>, vector<512x8xbf16>
    %c0_1 = arith.constant 0 : index
    %c0_2 = arith.constant 0 : index
    %1 = vector.load %arg2[%c0_1, %c0_2] : memref<8x8xbf16, #tpu.memory_space<vmem>>, vector<8x8xbf16>
    %cst = arith.constant dense<0.000000e+00> : vector<512x8xf32>
    %2 = tpu.matmul %0, %1, %cst {dimension_numbers = #tpu.dot_dimension_numbers<[1], [0], [0], [1], [0, 0, 1, 1], [], []>} : vector<512x8xbf16>, vector<8x8xbf16>, vector<512x8xf32> -> vector<512x8xf32>
    %c0_3 = arith.constant 0 : index
    %c0_4 = arith.constant 0 : index
    %3 = vector.load %arg5[%c0_3, %c0_4] : memref<1x8xf32, #tpu.memory_space<vmem>>, vector<1x8xf32>
    %4 = vector.broadcast %3 : vector<1x8xf32> to vector<512x8xf32>
    %5 = arith.addf %2, %4 : vector<512x8xf32>
    %6 = arith.truncf %5 : vector<512x8xf32> to vector<512x8xbf16>
    %c0_5 = arith.constant 0 : index
    %c0_6 = arith.constant 0 : index
    %7 = vector.load %arg8[%c0_5, %c0_6] : memref<512x8xbf16, #tpu.memory_space<vmem>>, vector<512x8xbf16>
    tpu.vector_store %arg8[%c0_5, %c0_6], %6 {strides = array<i32>} : memref<512x8xbf16, #tpu.memory_space<vmem>>, vector<512x8xbf16>,
    %c0_7 = arith.constant 0 : index
    %c0_8 = arith.constant 0 : index
    %8 = vector.load %arg3[%c0_7, %c0_8] : memref<8x8xbf16, #tpu.memory_space<vmem>>, vector<8x8xbf16>
    %cst_9 = arith.constant dense<0.000000e+00> : vector<512x8xf32>
    %9 = tpu.matmul %0, %8, %cst_9 {dimension_numbers = #tpu.dot_dimension_numbers<[1], [0], [0], [1], [0, 0, 1, 1], [], []>} : vector<512x8xbf16>, vector<8x8xbf16>, vector<512x8xf32> -> vector<512x8xf32>
    %c0_10 = arith.constant 0 : index
    %c0_11 = arith.constant 0 : index
    %10 = vector.load %arg6[%c0_10, %c0_11] : memref<1x8xf32, #tpu.memory_space<vmem>>, vector<1x8xf32>
    %11 = vector.broadcast %10 : vector<1x8xf32> to vector<512x8xf32>
    %12 = arith.addf %9, %11 : vector<512x8xf32>
    %13 = arith.truncf %12 : vector<512x8xf32> to vector<512x8xbf16>
    %c0_12 = arith.constant 0 : index
    %c0_13 = arith.constant 0 : index
    %14 = vector.load %arg9[%c0_12, %c0_13] : memref<512x8xbf16, #tpu.memory_space<vmem>>, vector<512x8xbf16>
    tpu.vector_store %arg9[%c0_12, %c0_13], %13 {strides = array<i32>} : memref<512x8xbf16, #tpu.memory_space<vmem>>, vector<512x8xbf16>,
    %c0_14 = arith.constant 0 : index
    %c0_15 = arith.constant 0 : index
    %15 = vector.load %arg4[%c0_14, %c0_15] : memref<8x8xbf16, #tpu.memory_space<vmem>>, vector<8x8xbf16>
    %cst_16 = arith.constant dense<0.000000e+00> : vector<512x8xf32>
    %16 = tpu.matmul %0, %15, %cst_16 {dimension_numbers = #tpu.dot_dimension_numbers<[1], [0], [0], [1], [0, 0, 1, 1], [], []>} : vector<512x8xbf16>, vector<8x8xbf16>, vector<512x8xf32> -> vector<512x8xf32>
    %c0_17 = arith.constant 0 : index
    %c0_18 = arith.constant 0 : index
    %17 = vector.load %arg7[%c0_17, %c0_18] : memref<1x8xf32, #tpu.memory_space<vmem>>, vector<1x8xf32>
    %18 = vector.broadcast %17 : vector<1x8xf32> to vector<512x8xf32>
    %19 = arith.addf %16, %18 : vector<512x8xf32>
    %20 = arith.truncf %19 : vector<512x8xf32> to vector<512x8xbf16>
    %c0_19 = arith.constant 0 : index
    %c0_20 = arith.constant 0 : index
    %21 = vector.load %arg10[%c0_19, %c0_20] : memref<512x8xbf16, #tpu.memory_space<vmem>>, vector<512x8xbf16>
    tpu.vector_store %arg10[%c0_19, %c0_20], %20 {strides = array<i32>} : memref<512x8xbf16, #tpu.memory_space<vmem>>, vector<512x8xbf16>,
    return
  }
  func.func @transform_0(%arg0: i32) -> (i32, i32) {
    %c0_i32 = arith.constant 0 : i32
    %c0_i32_0 = arith.constant 0 : i32
    return %arg0, %c0_i32 : i32, i32
  }
  func.func @transform_1(%arg0: i32) -> (i32, i32) {
    %c0_i32 = arith.constant 0 : i32
    %c0_i32_0 = arith.constant 0 : i32
    %c0_i32_1 = arith.constant 0 : i32
    return %c0_i32, %c0_i32_0 : i32, i32
  }
  func.func @transform_2(%arg0: i32) -> (i32, i32) {
    %c0_i32 = arith.constant 0 : i32
    %c0_i32_0 = arith.constant 0 : i32
    %c0_i32_1 = arith.constant 0 : i32
    return %c0_i32, %c0_i32_0 : i32, i32
  }
  func.func @transform_3(%arg0: i32) -> (i32, i32) {
    %c0_i32 = arith.constant 0 : i32
    %c0_i32_0 = arith.constant 0 : i32
    %c0_i32_1 = arith.constant 0 : i32
    return %c0_i32, %c0_i32_0 : i32, i32
  }
  func.func @transform_4(%arg0: i32) -> (i32, i32) {
    %c0_i32 = arith.constant 0 : i32
    %c0_i32_0 = arith.constant 0 : i32
    %c0_i32_1 = arith.constant 0 : i32
    return %c0_i32, %c0_i32_0 : i32, i32
  }
  func.func @transform_5(%arg0: i32) -> (i32, i32) {
    %c0_i32 = arith.constant 0 : i32
    %c0_i32_0 = arith.constant 0 : i32
    %c0_i32_1 = arith.constant 0 : i32
    return %c0_i32, %c0_i32_0 : i32, i32
  }
  func.func @transform_6(%arg0: i32) -> (i32, i32) {
    %c0_i32 = arith.constant 0 : i32
    %c0_i32_0 = arith.constant 0 : i32
    %c0_i32_1 = arith.constant 0 : i32
    return %c0_i32, %c0_i32_0 : i32, i32
  }
  func.func @transform_7(%arg0: i32) -> (i32, i32) {
    %c0_i32 = arith.constant 0 : i32
    %c0_i32_0 = arith.constant 0 : i32
    return %arg0, %c0_i32 : i32, i32
  }
  func.func @transform_8(%arg0: i32) -> (i32, i32) {
    %c0_i32 = arith.constant 0 : i32
    %c0_i32_0 = arith.constant 0 : i32
    return %arg0, %c0_i32 : i32, i32
  }
  func.func @transform_9(%arg0: i32) -> (i32, i32) {
    %c0_i32 = arith.constant 0 : i32
    %c0_i32_0 = arith.constant 0 : i32
    return %arg0, %c0_i32 : i32, i32
  }
}

</mosaic_0001>

<llo_original>
// kernel: tpu_custom_call.1
$region0: #{tpu_custom_call.1}
  #allocation0 [shape = 'u32[]', space=smem, size = 0x4, offset = 0x4, fixed_abs, tag = 'smem constant byte address 0x4 - core index']
  #allocation1 [shape = 'u32[72,128]{1,0:T(1,128)}', space=vmem, size = 0x9000, scoped, tag = 'internal scratch']
  %s0 = inlined_call_operand.vmem [shape: bf16[1024,8], index: 0, kind: input, shape index: {}]
  %s1 = inlined_call_operand.vmem [shape: bf16[8,8], index: 1, kind: input, shape index: {}]
  %s2 = inlined_call_operand.vmem [shape: bf16[8,8], index: 2, kind: input, shape index: {}]
  %s3 = inlined_call_operand.vmem [shape: bf16[8,8], index: 3, kind: input, shape index: {}]
  %s4 = inlined_call_operand.vmem [shape: f32[1,8], index: 4, kind: input, shape index: {}]
  %s5 = inlined_call_operand.vmem [shape: f32[1,8], index: 5, kind: input, shape index: {}]
  %s6 = inlined_call_operand.vmem [shape: f32[1,8], index: 6, kind: input, shape index: {}]
  %s7 = inlined_call_operand.vmem [shape: bf16[1024,8], index: 7, kind: output, shape index: {0}]
  %s8 = inlined_call_operand.vmem [shape: bf16[1024,8], index: 8, kind: output, shape index: {1}]
  %s9 = inlined_call_operand.vmem [shape: bf16[1024,8], index: 9, kind: output, shape index: {2}]
  %10 = xla_tuple %s7, %s8, %s9
  %s11 = sld [smem:[#allocation0]]
  $region77: #{tpu_custom_call.1} parent=0
    _
  %s13 = ssub.s32 1, %s11
  %s14 = scalar_select 0, %s13, %s11
  loop: start=0, step=1, limit=4
  $region2: #{tpu_custom_call.1} parent=0 // loop_pre_header
    _
  $region3: #{tpu_custom_call.1} parent=0 // loop_header
    %s16 = sphi 0, %s20
    %p17 = scmp.ge.s32.totalorder %s16, 4
    %s26 = sphi 0, %s28
    %s29 = sphi 0, %s26
    %s30 = sphi 0, %s29
    %s46 = sphi 0, %s30
    %s50 = sphi 0, %s50
    %s52 = sphi 0, %s50
    %s53 = sphi 0, %s52
    %s67 = sphi 0, %s53
    %s71 = sphi 0, %s71
    %s73 = sphi 0, %s71
    %s74 = sphi 0, %s73
    %s88 = sphi 0, %s74
    %s92 = sphi 0, %s92
    %s94 = sphi 0, %s92
    %s95 = sphi 0, %s94
    %s109 = sphi 0, %s95
    %s113 = sphi 0, %s113
    %s115 = sphi 0, %s113
    %s116 = sphi 0, %s115
    %s130 = sphi 0, %s116
    %s134 = sphi 0, %s134
    %s136 = sphi 0, %s134
    %s137 = sphi 0, %s136
    %s151 = sphi 0, %s137
    %s155 = sphi 0, %s155
    %s157 = sphi 0, %s155
    %s158 = sphi 0, %s157
    %s172 = sphi 0, %s158
    %s178 = sphi 0, %s180
    %s181 = sphi 0, %s178
    %s182 = sphi 0, %s181
    %s198 = sphi 0, %s182
    %s204 = sphi 0, %s206
    %s207 = sphi 0, %s204
    %s208 = sphi 0, %s207
    %s224 = sphi 0, %s208
    %s230 = sphi 0, %s232
    %s233 = sphi 0, %s230
    %s234 = sphi 0, %s233
    %s250 = sphi 0, %s234
  $region4: #{tpu_custom_call.1} parent=0 // loop_header_branch
    %19 = sbr.rel (%p17) target = $region8
  $region5: #{tpu_custom_call.1} parent=0 // loop_body
    %s21 = ssub.s32 %s16, 1
    %s22 = ssub.s32 %s16, 2
    %s23 = sadd.s32 %s16, 1
    %s24 = ssub.s32 %s16, %s23
    %p25 = scmp.eq.s32.totalorder %s24, 0
    %s27 = sadd.s32 %s26, 1
    %s28 = scalar_select %p25, %s26, %s27
    %p31 = pneg %p25
    %p32 = scmp.eq.s32.totalorder %s16, 1
    %p33 = por %p31, %p32
    %p34 = scmp.ne.s32.totalorder %s26, %s29
    %p35 = scmp.eq.s32.totalorder %s16, 0
    %p36 = por %p34, %p35
    %p37 = scmp.ne.s32.totalorder %s26, %s29
    %p38 = scmp.eq.s32.totalorder %s21, 1
    %p39 = por %p37, %p38
    %p40 = scmp.ne.s32.totalorder %s29, %s30
    %p41 = scmp.eq.s32.totalorder %s21, 0
    %p42 = por %p40, %p41
    %p43 = scmp.ne.s32.totalorder %s29, %s30
    %p44 = scmp.eq.s32.totalorder %s22, 1
    %p45 = por %p43, %p44
    %p47 = scmp.ne.s32.totalorder %s30, %s46
    %p48 = scmp.eq.s32.totalorder %s22, 0
    %p49 = por %p47, %p48
    %s51 = sadd.s32 %s50, 1
    %p54 = scmp.eq.s32.totalorder %s16, 1
    %p55 = scmp.ne.s32.totalorder %s50, %s52
    %p56 = scmp.eq.s32.totalorder %s16, 0
    %p57 = por %p55, %p56
    %p58 = scmp.ne.s32.totalorder %s50, %s52
    %p59 = scmp.eq.s32.totalorder %s21, 1
    %p60 = por %p58, %p59
    %p61 = scmp.ne.s32.totalorder %s52, %s53
    %p62 = scmp.eq.s32.totalorder %s21, 0
    %p63 = por %p61, %p62
    %p64 = scmp.ne.s32.totalorder %s52, %s53
    %p65 = scmp.eq.s32.totalorder %s22, 1
    %p66 = por %p64, %p65
    %p68 = scmp.ne.s32.totalorder %s53, %s67
    %p69 = scmp.eq.s32.totalorder %s22, 0
    %p70 = por %p68, %p69
    %s72 = sadd.s32 %s71, 1
    %p75 = scmp.eq.s32.totalorder %s16, 1
    %p76 = scmp.ne.s32.totalorder %s71, %s73
    %p77 = scmp.eq.s32.totalorder %s16, 0
    %p78 = por %p76, %p77
    %p79 = scmp.ne.s32.totalorder %s71, %s73
    %p80 = scmp.eq.s32.totalorder %s21, 1
    %p81 = por %p79, %p80
    %p82 = scmp.ne.s32.totalorder %s73, %s74
    %p83 = scmp.eq.s32.totalorder %s21, 0
    %p84 = por %p82, %p83
    %p85 = scmp.ne.s32.totalorder %s73, %s74
    %p86 = scmp.eq.s32.totalorder %s22, 1
    %p87 = por %p85, %p86
    %p89 = scmp.ne.s32.totalorder %s74, %s88
    %p90 = scmp.eq.s32.totalorder %s22, 0
    %p91 = por %p89, %p90
    %s93 = sadd.s32 %s92, 1
    %p96 = scmp.eq.s32.totalorder %s16, 1
    %p97 = scmp.ne.s32.totalorder %s92, %s94
    %p98 = scmp.eq.s32.totalorder %s16, 0
    %p99 = por %p97, %p98
    %p100 = scmp.ne.s32.totalorder %s92, %s94
    %p101 = scmp.eq.s32.totalorder %s21, 1
    %p102 = por %p100, %p101
    %p103 = scmp.ne.s32.totalorder %s94, %s95
    %p104 = scmp.eq.s32.totalorder %s21, 0
    %p105 = por %p103, %p104
    %p106 = scmp.ne.s32.totalorder %s94, %s95
    %p107 = scmp.eq.s32.totalorder %s22, 1
    %p108 = por %p106, %p107
    %p110 = scmp.ne.s32.totalorder %s95, %s109
    %p111 = scmp.eq.s32.totalorder %s22, 0
    %p112 = por %p110, %p111
    %s114 = sadd.s32 %s113, 1
    %p117 = scmp.eq.s32.totalorder %s16, 1
    %p118 = scmp.ne.s32.totalorder %s113, %s115
    %p119 = scmp.eq.s32.totalorder %s16, 0
    %p120 = por %p118, %p119
    %p121 = scmp.ne.s32.totalorder %s113, %s115
    %p122 = scmp.eq.s32.totalorder %s21, 1
    %p123 = por %p121, %p122
    %p124 = scmp.ne.s32.totalorder %s115, %s116
    %p125 = scmp.eq.s32.totalorder %s21, 0
    %p126 = por %p124, %p125
    %p127 = scmp.ne.s32.totalorder %s115, %s116
    %p128 = scmp.eq.s32.totalorder %s22, 1
    %p129 = por %p127, %p128
    %p131 = scmp.ne.s32.totalorder %s116, %s130
    %p132 = scmp.eq.s32.totalorder %s22, 0
    %p133 = por %p131, %p132
    %s135 = sadd.s32 %s134, 1
    %p138 = scmp.eq.s32.totalorder %s16, 1
    %p139 = scmp.ne.s32.totalorder %s134, %s136
    %p140 = scmp.eq.s32.totalorder %s16, 0
    %p141 = por %p139, %p140
    %p142 = scmp.ne.s32.totalorder %s134, %s136
    %p143 = scmp.eq.s32.totalorder %s21, 1
    %p144 = por %p142, %p143
    %p145 = scmp.ne.s32.totalorder %s136, %s137
    %p146 = scmp.eq.s32.totalorder %s21, 0
    %p147 = por %p145, %p146
    %p148 = scmp.ne.s32.totalorder %s136, %s137
    %p149 = scmp.eq.s32.totalorder %s22, 1
    %p150 = por %p148, %p149
    %p152 = scmp.ne.s32.totalorder %s137, %s151
    %p153 = scmp.eq.s32.totalorder %s22, 0
    %p154 = por %p152, %p153
    %s156 = sadd.s32 %s155, 1
    %p159 = scmp.eq.s32.totalorder %s16, 1
    %p160 = scmp.ne.s32.totalorder %s155, %s157
    %p161 = scmp.eq.s32.totalorder %s16, 0
    %p162 = por %p160, %p161
    %p163 = scmp.ne.s32.totalorder %s155, %s157
    %p164 = scmp.eq.s32.totalorder %s21, 1
    %p165 = por %p163, %p164
    %p166 = scmp.ne.s32.totalorder %s157, %s158
    %p167 = scmp.eq.s32.totalorder %s21, 0
    %p168 = por %p166, %p167
    %p169 = scmp.ne.s32.totalorder %s157, %s158
    %p170 = scmp.eq.s32.totalorder %s22, 1
    %p171 = por %p169, %p170
    %p173 = scmp.ne.s32.totalorder %s158, %s172
    %p174 = scmp.eq.s32.totalorder %s22, 0
    %p175 = por %p173, %p174
    %s176 = ssub.s32 %s16, %s23
    %p177 = scmp.eq.s32.totalorder %s176, 0
    %s179 = sadd.s32 %s178, 1
    %s180 = scalar_select %p177, %s178, %s179
    %p183 = pneg %p177
    %p184 = scmp.eq.s32.totalorder %s16, 1
    %p185 = por %p183, %p184
    %p186 = scmp.ne.s32.totalorder %s178, %s181
    %p187 = scmp.eq.s32.totalorder %s16, 0
    %p188 = por %p186, %p187
    %p189 = scmp.ne.s32.totalorder %s178, %s181
    %p190 = scmp.eq.s32.totalorder %s21, 1
    %p191 = por %p189, %p190
    %p192 = scmp.ne.s32.totalorder %s181, %s182
    %p193 = scmp.eq.s32.totalorder %s21, 0
    %p194 = por %p192, %p193
    %p195 = scmp.ne.s32.totalorder %s181, %s182
    %p196 = scmp.eq.s32.totalorder %s22, 1
    %p197 = por %p195, %p196
    %p199 = scmp.ne.s32.totalorder %s182, %s198
    %p200 = scmp.eq.s32.totalorder %s22, 0
    %p201 = por %p199, %p200
    %s202 = ssub.s32 %s16, %s23
    %p203 = scmp.eq.s32.totalorder %s202, 0
    %s205 = sadd.s32 %s204, 1
    %s206 = scalar_select %p203, %s204, %s205
    %p209 = pneg %p203
    %p210 = scmp.eq.s32.totalorder %s16, 1
    %p211 = por %p209, %p210
    %p212 = scmp.ne.s32.totalorder %s204, %s207
    %p213 = scmp.eq.s32.totalorder %s16, 0
    %p214 = por %p212, %p213
    %p215 = scmp.ne.s32.totalorder %s204, %s207
    %p216 = scmp.eq.s32.totalorder %s21, 1
    %p217 = por %p215, %p216
    %p218 = scmp.ne.s32.totalorder %s207, %s208
    %p219 = scmp.eq.s32.totalorder %s21, 0
    %p220 = por %p218, %p219
    %p221 = scmp.ne.s32.totalorder %s207, %s208
    %p222 = scmp.eq.s32.totalorder %s22, 1
    %p223 = por %p221, %p222
    %p225 = scmp.ne.s32.totalorder %s208, %s224
    %p226 = scmp.eq.s32.totalorder %s22, 0
    %p227 = por %p225, %p226
    %s228 = ssub.s32 %s16, %s23
    %p229 = scmp.eq.s32.totalorder %s228, 0
    %s231 = sadd.s32 %s230, 1
    %s232 = scalar_select %p229, %s230, %s231
    %p235 = pneg %p229
    %p236 = scmp.eq.s32.totalorder %s16, 1
    %p237 = por %p235, %p236
    %p238 = scmp.ne.s32.totalorder %s230, %s233
    %p239 = scmp.eq.s32.totalorder %s16, 0
    %p240 = por %p238, %p239
    %p241 = scmp.ne.s32.totalorder %s230, %s233
    %p242 = scmp.eq.s32.totalorder %s21, 1
    %p243 = por %p241, %p242
    %p244 = scmp.ne.s32.totalorder %s233, %s234
    %p245 = scmp.eq.s32.totalorder %s21, 0
    %p246 = por %p244, %p245
    %p247 = scmp.ne.s32.totalorder %s233, %s234
    %p248 = scmp.eq.s32.totalorder %s22, 1
    %p249 = por %p247, %p248
    %p251 = scmp.ne.s32.totalorder %s234, %s250
    %p252 = scmp.eq.s32.totalorder %s22, 0
    %p253 = por %p251, %p252
    %p254 = scmp.le.s32.totalorder 1, %s16
    %p255 = scmp.lt.s32.totalorder %s16, 3
    %p256 = pnand %p254, %p255
    %p257 = pneg %p256
    // Predicated region
    $region9: #{tpu_custom_call.1} parent=5 // pred_check
      _
    $region10: #{tpu_custom_call.1} parent=5 // pred_check_branch
      %259 = sbr.rel (%p256) target = $region12
    $region11: #{tpu_custom_call.1} parent=5 // pred_region
      %s260 = ssub.s32 %s16, 1
      // Predicated region
      $region13: #{tpu_custom_call.1} parent=11 // pred_check
        %p261 = pneg %p63
      $region14: #{tpu_custom_call.1} parent=11 // pred_check_branch
        %263 = sbr.rel (%p261) target = $region16
      $region15: #{tpu_custom_call.1} parent=11 // pred_region
        _
      $region16: #{tpu_custom_call.1} parent=11 // pred_fallthru
        _
      // Predicated region
      $region17: #{tpu_custom_call.1} parent=11 // pred_check
        %p264 = pneg %p84
      $region18: #{tpu_custom_call.1} parent=11 // pred_check_branch
        %266 = sbr.rel (%p264) target = $region20
      $region19: #{tpu_custom_call.1} parent=11 // pred_region
        _
      $region20: #{tpu_custom_call.1} parent=11 // pred_fallthru
        _
      // Predicated region
      $region21: #{tpu_custom_call.1} parent=11 // pred_check
        %p267 = pneg %p105
      $region22: #{tpu_custom_call.1} parent=11 // pred_check_branch
        %269 = sbr.rel (%p267) target = $region24
      $region23: #{tpu_custom_call.1} parent=11 // pred_region
        _
      $region24: #{tpu_custom_call.1} parent=11 // pred_fallthru
        _
      // Predicated region
      $region25: #{tpu_custom_call.1} parent=11 // pred_check
        %p270 = pneg %p126
      $region26: #{tpu_custom_call.1} parent=11 // pred_check_branch
        %272 = sbr.rel (%p270) target = $region28
      $region27: #{tpu_custom_call.1} parent=11 // pred_region
        _
      $region28: #{tpu_custom_call.1} parent=11 // pred_fallthru
        _
      // Predicated region
      $region29: #{tpu_custom_call.1} parent=11 // pred_check
        %p273 = pneg %p147
      $region30: #{tpu_custom_call.1} parent=11 // pred_check_branch
        %275 = sbr.rel (%p273) target = $region32
      $region31: #{tpu_custom_call.1} parent=11 // pred_region
        _
      $region32: #{tpu_custom_call.1} parent=11 // pred_fallthru
        _
      // Predicated region
      $region33: #{tpu_custom_call.1} parent=11 // pred_check
        %p276 = pneg %p168
      $region34: #{tpu_custom_call.1} parent=11 // pred_check_branch
        %278 = sbr.rel (%p276) target = $region36
      $region35: #{tpu_custom_call.1} parent=11 // pred_region
        _
      $region36: #{tpu_custom_call.1} parent=11 // pred_fallthru
        _
    $region12: #{tpu_custom_call.1} parent=5 // pred_fallthru
      _
    %p279 = scmp.lt.s32.totalorder %s16, 2
    // Predicated region
    $region37: #{tpu_custom_call.1} parent=5 // pred_check
      %p280 = pneg %p279
    $region38: #{tpu_custom_call.1} parent=5 // pred_check_branch
      %282 = sbr.rel (%p280) target = $region40
    $region39: #{tpu_custom_call.1} parent=5 // pred_region
      // Predicated region
      $region41: #{tpu_custom_call.1} parent=39 // pred_check
        %p283 = pneg %p36
      $region42: #{tpu_custom_call.1} parent=39 // pred_check_branch
        %285 = sbr.rel (%p283) target = $region44
      $region43: #{tpu_custom_call.1} parent=39 // pred_region
        %s286 = smul.u32 64, %s16
        %p287 = scmp.lt.s32.totalorder %s286, 127
        %s288 = scalar_select %p287, %s286, 127
        %s289 = smul.addr %s288, 4
        %s290 = scalar_lea.vmem %s0, %s289
        %s291 = smul.u32 64, %s16
      $region44: #{tpu_custom_call.1} parent=39 // pred_fallthru
        _
    $region40: #{tpu_custom_call.1} parent=5 // pred_fallthru
      _
    %p292 = scmp.le.s32.totalorder 1, %s16
    %p293 = scmp.lt.s32.totalorder %s16, 3
    %p294 = pnand %p292, %p293
    %p295 = pneg %p294
    // Predicated region
    $region45: #{tpu_custom_call.1} parent=5 // pred_check
      _
    $region46: #{tpu_custom_call.1} parent=5 // pred_check_branch
      %297 = sbr.rel (%p294) target = $region48
    $region47: #{tpu_custom_call.1} parent=5 // pred_region
      %s298 = ssub.s32 %s16, 1
      %s299 = smul.u32 64, %s21
      %p300 = scmp.lt.s32.totalorder %s299, 127
      %s301 = scalar_select %p300, %s299, 127
      %s302 = smul.addr %s301, 4
      %s303 = scalar_lea.vmem %s0, %s302
      %p304 = pneg %p42
      %p305 = pneg %p39
      %p306 = pneg %p63
      %p307 = pneg %p60
      %p308 = pneg %p84
      %p309 = pneg %p81
      %p310 = pneg %p105
      %p311 = pneg %p102
      %p312 = pneg %p126
      %p313 = pneg %p123
      %p314 = pneg %p147
      %p315 = pneg %p144
      %p316 = pneg %p168
      %p317 = pneg %p165
      %p318 = pneg %p194
      %p319 = pneg %p191
      %s320 = smul.u32 64, %s21
      %p321 = scmp.lt.s32.totalorder %s320, 127
      %s322 = scalar_select %p321, %s320, 127
      %s323 = smul.addr %s322, 4
      %s324 = scalar_lea.vmem %s7, %s323
      %p325 = pneg %p220
      %p326 = pneg %p217
      %s327 = smul.u32 64, %s21
      %p328 = scmp.lt.s32.totalorder %s327, 127
      %s329 = scalar_select %p328, %s327, 127
      %s330 = smul.addr %s329, 4
      %s331 = scalar_lea.vmem %s8, %s330
      %p332 = pneg %p246
      %p333 = pneg %p243
      %s334 = smul.u32 64, %s21
      %p335 = scmp.lt.s32.totalorder %s334, 127
      %s336 = scalar_select %p335, %s334, 127
      %s337 = smul.addr %s336, 4
      %s338 = scalar_lea.vmem %s9, %s337
      %s339 = smul.u32 64, %s21
      %p340 = scmp.lt.s32.totalorder %s339, 127
      %s341 = scalar_select %p340, %s339, 127
      %s342 = smul.addr %s341, 4
      %s343 = scalar_lea.vmem %s0, %s342
      %s344 = smul.u32 64, %s21
      %s345 = smul.u32 64, %s21
      %p346 = scmp.lt.s32.totalorder %s345, 127
      %s347 = scalar_select %p346, %s345, 127
      %s348 = smul.addr %s347, 4
      %s349 = scalar_lea.vmem %s7, %s348
      %s350 = smul.u32 64, %s21
      %s351 = smul.u32 64, %s21
      %p352 = scmp.lt.s32.totalorder %s351, 127
      %s353 = scalar_select %p352, %s351, 127
      %s354 = smul.addr %s353, 4
      %s355 = scalar_lea.vmem %s8, %s354
      %s356 = smul.u32 64, %s21
      %s357 = smul.u32 64, %s21
      %p358 = scmp.lt.s32.totalorder %s357, 127
      %s359 = scalar_select %p358, %s357, 127
      %s360 = smul.addr %s359, 4
      %s361 = scalar_lea.vmem %s9, %s360
      %s362 = smul.u32 64, %s21
      %v364 = vld [vmem:[%s343] sm:$0xf]
      %v365 = vld [vmem:[%s343 + $0x4] sm:$0xf]
      %v366 = vld [vmem:[%s343 + $0x8] sm:$0xf]
      %v367 = vld [vmem:[%s343 + $0xc] sm:$0xf]
      %v368 = vld [vmem:[%s343 + $0x10] sm:$0xf]
      %v369 = vld [vmem:[%s343 + $0x14] sm:$0xf]
      %v370 = vld [vmem:[%s343 + $0x18] sm:$0xf]
      %v371 = vld [vmem:[%s343 + $0x1c] sm:$0xf]
      %v372 = vld [vmem:[%s343 + $0x20] sm:$0xf]
      %v373 = vld [vmem:[%s343 + $0x24] sm:$0xf]
      %v374 = vld [vmem:[%s343 + $0x28] sm:$0xf]
      %v375 = vld [vmem:[%s343 + $0x2c] sm:$0xf]
      %v376 = vld [vmem:[%s343 + $0x30] sm:$0xf]
      %v377 = vld [vmem:[%s343 + $0x34] sm:$0xf]
      %v378 = vld [vmem:[%s343 + $0x38] sm:$0xf]
      %v379 = vld [vmem:[%s343 + $0x3c] sm:$0xf]
      %v380 = vld [vmem:[%s343 + $0x40] sm:$0xf]
      %v381 = vld [vmem:[%s343 + $0x44] sm:$0xf]
      %v382 = vld [vmem:[%s343 + $0x48] sm:$0xf]
      %v383 = vld [vmem:[%s343 + $0x4c] sm:$0xf]
      %v384 = vld [vmem:[%s343 + $0x50] sm:$0xf]
      %v385 = vld [vmem:[%s343 + $0x54] sm:$0xf]
      %v386 = vld [vmem:[%s343 + $0x58] sm:$0xf]
      %v387 = vld [vmem:[%s343 + $0x5c] sm:$0xf]
      %v388 = vld [vmem:[%s343 + $0x60] sm:$0xf]
      %v389 = vld [vmem:[%s343 + $0x64] sm:$0xf]
      %v390 = vld [vmem:[%s343 + $0x68] sm:$0xf]
      %v391 = vld [vmem:[%s343 + $0x6c] sm:$0xf]
      %v392 = vld [vmem:[%s343 + $0x70] sm:$0xf]
      %v393 = vld [vmem:[%s343 + $0x74] sm:$0xf]
      %v394 = vld [vmem:[%s343 + $0x78] sm:$0xf]
      %v395 = vld [vmem:[%s343 + $0x7c] sm:$0xf]
      %v396 = vld [vmem:[%s343 + $0x80] sm:$0xf]
      %v397 = vld [vmem:[%s343 + $0x84] sm:$0xf]
      %v398 = vld [vmem:[%s343 + $0x88] sm:$0xf]
      %v399 = vld [vmem:[%s343 + $0x8c] sm:$0xf]
      %v400 = vld [vmem:[%s343 + $0x90] sm:$0xf]
      %v401 = vld [vmem:[%s343 + $0x94] sm:$0xf]
      %v402 = vld [vmem:[%s343 + $0x98] sm:$0xf]
      %v403 = vld [vmem:[%s343 + $0x9c] sm:$0xf]
      %v404 = vld [vmem:[%s343 + $0xa0] sm:$0xf]
      %v405 = vld [vmem:[%s343 + $0xa4] sm:$0xf]
      %v406 = vld [vmem:[%s343 + $0xa8] sm:$0xf]
      %v407 = vld [vmem:[%s343 + $0xac] sm:$0xf]
      %v408 = vld [vmem:[%s343 + $0xb0] sm:$0xf]
      %v409 = vld [vmem:[%s343 + $0xb4] sm:$0xf]
      %v410 = vld [vmem:[%s343 + $0xb8] sm:$0xf]
      %v411 = vld [vmem:[%s343 + $0xbc] sm:$0xf]
      %v412 = vld [vmem:[%s343 + $0xc0] sm:$0xf]
      %v413 = vld [vmem:[%s343 + $0xc4] sm:$0xf]
      %v414 = vld [vmem:[%s343 + $0xc8] sm:$0xf]
      %v415 = vld [vmem:[%s343 + $0xcc] sm:$0xf]
      %v416 = vld [vmem:[%s343 + $0xd0] sm:$0xf]
      %v417 = vld [vmem:[%s343 + $0xd4] sm:$0xf]
      %v418 = vld [vmem:[%s343 + $0xd8] sm:$0xf]
      %v419 = vld [vmem:[%s343 + $0xdc] sm:$0xf]
      %v420 = vld [vmem:[%s343 + $0xe0] sm:$0xf]
      %v421 = vld [vmem:[%s343 + $0xe4] sm:$0xf]
      %v422 = vld [vmem:[%s343 + $0xe8] sm:$0xf]
      %v423 = vld [vmem:[%s343 + $0xec] sm:$0xf]
      %v424 = vld [vmem:[%s343 + $0xf0] sm:$0xf]
      %v425 = vld [vmem:[%s343 + $0xf4] sm:$0xf]
      %v426 = vld [vmem:[%s343 + $0xf8] sm:$0xf]
      %v427 = vld [vmem:[%s343 + $0xfc] sm:$0xf]
      %v428 = vld [vmem:[%s1] sm:$0xf]
      %v429 = vld [vmem:[%s4] sm:$0x1]
      %v431 = vperm.slane %v429, 0
      %v497 = vunpack.c.l.b16 %v364
      %v498 = vunpack.c.l.b16 %v365
      %v499 = vunpack.c.l.b16 %v366
      %v500 = vunpack.c.l.b16 %v367
      %v501 = vunpack.c.l.b16 %v368
      %v502 = vunpack.c.l.b16 %v369
      %v503 = vunpack.c.l.b16 %v370
      %v504 = vunpack.c.l.b16 %v371
      %v505 = vunpack.c.l.b16 %v372
      %v506 = vunpack.c.l.b16 %v373
      %v507 = vunpack.c.l.b16 %v374
      %v508 = vunpack.c.l.b16 %v375
      %v509 = vunpack.c.l.b16 %v376
      %v510 = vunpack.c.l.b16 %v377
      %v511 = vunpack.c.l.b16 %v378
      %v512 = vunpack.c.l.b16 %v379
      %v513 = vunpack.c.l.b16 %v380
      %v514 = vunpack.c.l.b16 %v381
      %v515 = vunpack.c.l.b16 %v382
      %v516 = vunpack.c.l.b16 %v383
      %v517 = vunpack.c.l.b16 %v384
      %v518 = vunpack.c.l.b16 %v385
      %v519 = vunpack.c.l.b16 %v386
      %v520 = vunpack.c.l.b16 %v387
      %v521 = vunpack.c.l.b16 %v388
      %v522 = vunpack.c.l.b16 %v389
      %v523 = vunpack.c.l.b16 %v390
      %v524 = vunpack.c.l.b16 %v391
      %v525 = vunpack.c.l.b16 %v392
      %v526 = vunpack.c.l.b16 %v393
      %v527 = vunpack.c.l.b16 %v394
      %v528 = vunpack.c.l.b16 %v395
      %v529 = vunpack.c.l.b16 %v396
      %v530 = vunpack.c.l.b16 %v397
      %v531 = vunpack.c.l.b16 %v398
      %v532 = vunpack.c.l.b16 %v399
      %v533 = vunpack.c.l.b16 %v400
      %v534 = vunpack.c.l.b16 %v401
      %v535 = vunpack.c.l.b16 %v402
      %v536 = vunpack.c.l.b16 %v403
      %v537 = vunpack.c.l.b16 %v404
      %v538 = vunpack.c.l.b16 %v405
      %v539 = vunpack.c.l.b16 %v406
      %v540 = vunpack.c.l.b16 %v407
      %v541 = vunpack.c.l.b16 %v408
      %v542 = vunpack.c.l.b16 %v409
      %v543 = vunpack.c.l.b16 %v410
      %v544 = vunpack.c.l.b16 %v411
      %v545 = vunpack.c.l.b16 %v412
      %v546 = vunpack.c.l.b16 %v413
      %v547 = vunpack.c.l.b16 %v414
      %v548 = vunpack.c.l.b16 %v415
      %v549 = vunpack.c.l.b16 %v416
      %v550 = vunpack.c.l.b16 %v417
      %v551 = vunpack.c.l.b16 %v418
      %v552 = vunpack.c.l.b16 %v419
      %v553 = vunpack.c.l.b16 %v420
      %v554 = vunpack.c.l.b16 %v421
      %v555 = vunpack.c.l.b16 %v422
      %v556 = vunpack.c.l.b16 %v423
      %v557 = vunpack.c.l.b16 %v424
      %v558 = vunpack.c.l.b16 %v425
      %v559 = vunpack.c.l.b16 %v426
      %v560 = vunpack.c.l.b16 %v427
      %v561 = vpack.c.b16 %v498, %v497
      %v562 = vpack.c.b16 %v500, %v499
      %v563 = vpack.c.b16 %v502, %v501
      %v564 = vpack.c.b16 %v504, %v503
      %v565 = vpack.c.b16 %v506, %v505
      %v566 = vpack.c.b16 %v508, %v507
      %v567 = vpack.c.b16 %v510, %v509
      %v568 = vpack.c.b16 %v512, %v511
      %v569 = vpack.c.b16 %v514, %v513
      %v570 = vpack.c.b16 %v516, %v515
      %v571 = vpack.c.b16 %v518, %v517
      %v572 = vpack.c.b16 %v520, %v519
      %v573 = vpack.c.b16 %v522, %v521
      %v574 = vpack.c.b16 %v524, %v523
      %v575 = vpack.c.b16 %v526, %v525
      %v576 = vpack.c.b16 %v528, %v527
      %v577 = vpack.c.b16 %v530, %v529
      %v578 = vpack.c.b16 %v532, %v531
      %v579 = vpack.c.b16 %v534, %v533
      %v580 = vpack.c.b16 %v536, %v535
      %v581 = vpack.c.b16 %v538, %v537
      %v582 = vpack.c.b16 %v540, %v539
      %v583 = vpack.c.b16 %v542, %v541
      %v584 = vpack.c.b16 %v544, %v543
      %v585 = vpack.c.b16 %v546, %v545
      %v586 = vpack.c.b16 %v548, %v547
      %v587 = vpack.c.b16 %v550, %v549
      %v588 = vpack.c.b16 %v552, %v551
      %v589 = vpack.c.b16 %v554, %v553
      %v590 = vpack.c.b16 %v556, %v555
      %v591 = vpack.c.b16 %v558, %v557
      %v592 = vpack.c.b16 %v560, %v559
      %vm593 = vcmask 64512
      %v595 = vsel %vm593, %v561, 0
      %v598 = vsel %vm593, %v562, 0
      %v601 = vsel %vm593, %v563, 0
      %v604 = vsel %vm593, %v564, 0
      %v607 = vsel %vm593, %v565, 0
      %v610 = vsel %vm593, %v566, 0
      %v613 = vsel %vm593, %v567, 0
      %v616 = vsel %vm593, %v568, 0
      %v619 = vsel %vm593, %v569, 0
      %v622 = vsel %vm593, %v570, 0
      %v625 = vsel %vm593, %v571, 0
      %v628 = vsel %vm593, %v572, 0
      %v631 = vsel %vm593, %v573, 0
      %v634 = vsel %vm593, %v574, 0
      %v637 = vsel %vm593, %v575, 0
      %v640 = vsel %vm593, %v576, 0
      %v643 = vsel %vm593, %v577, 0
      %v646 = vsel %vm593, %v578, 0
      %v649 = vsel %vm593, %v579, 0
      %v652 = vsel %vm593, %v580, 0
      %v655 = vsel %vm593, %v581, 0
      %v658 = vsel %vm593, %v582, 0
      %v661 = vsel %vm593, %v583, 0
      %v664 = vsel %vm593, %v584, 0
      %v667 = vsel %vm593, %v585, 0
      %v670 = vsel %vm593, %v586, 0
      %v673 = vsel %vm593, %v587, 0
      %v676 = vsel %vm593, %v588, 0
      %v679 = vsel %vm593, %v589, 0
      %v682 = vsel %vm593, %v590, 0
      %v685 = vsel %vm593, %v591, 0
      %v688 = vsel %vm593, %v592, 0
      %vm690 = vcmask 1043456
      %v692 = vsel %vm690, %v428, 0
      %694 = vmatpush.bf16.msra.mxu0 0
      %695 = vmatpush.bf16.msra.mxu0 0
      %696 = vmatpush.bf16.msra.mxu0 0
      %697 = vmatpush.bf16.msra.mxu0 0
      %698 = vmatpush.bf16.msra.mxu0 0
      %699 = vmatpush.bf16.msra.mxu0 0
      %700 = vmatpush.bf16.msra.mxu0 0
      %701 = vmatpush.bf16.msra.mxu0 %v692
      %702 = vmatmul.bf16.gmra.mxu0 %v595
      %v703 = vpop.f32.mrf.mxu0
      %v704 = vadd.f32 %v431, %v703
      %v705 = vpop.f32.mrf.mxu0
      %v706 = vadd.f32 %v431, %v705
      %707 = vmatmul.bf16.gmra.mxu0 %v598
      %v708 = vpop.f32.mrf.mxu0
      %v709 = vadd.f32 %v431, %v708
      %v710 = vpop.f32.mrf.mxu0
      %v711 = vadd.f32 %v431, %v710
      %712 = vmatmul.bf16.gmra.mxu0 %v601
      %v713 = vpop.f32.mrf.mxu0
      %v714 = vadd.f32 %v431, %v713
      %v715 = vpop.f32.mrf.mxu0
      %v716 = vadd.f32 %v431, %v715
      %717 = vmatmul.bf16.gmra.mxu0 %v604
      %v718 = vpop.f32.mrf.mxu0
      %v719 = vadd.f32 %v431, %v718
      %v720 = vpop.f32.mrf.mxu0
      %v721 = vadd.f32 %v431, %v720
      %722 = vmatmul.bf16.gmra.mxu0 %v607
      %v723 = vpop.f32.mrf.mxu0
      %v724 = vadd.f32 %v431, %v723
      %v725 = vpop.f32.mrf.mxu0
      %v726 = vadd.f32 %v431, %v725
      %727 = vmatmul.bf16.gmra.mxu0 %v610
      %v728 = vpop.f32.mrf.mxu0
      %v729 = vadd.f32 %v431, %v728
      %v730 = vpop.f32.mrf.mxu0
      %v731 = vadd.f32 %v431, %v730
      %732 = vmatmul.bf16.gmra.mxu0 %v613
      %v733 = vpop.f32.mrf.mxu0
      %v734 = vadd.f32 %v431, %v733
      %v735 = vpop.f32.mrf.mxu0
      %v736 = vadd.f32 %v431, %v735
      %737 = vmatmul.bf16.gmra.mxu0 %v616
      %v738 = vpop.f32.mrf.mxu0
      %v739 = vadd.f32 %v431, %v738
      %v740 = vpop.f32.mrf.mxu0
      %v741 = vadd.f32 %v431, %v740
      %742 = vmatmul.bf16.gmra.mxu0 %v619
      %v743 = vpop.f32.mrf.mxu0
      %v744 = vadd.f32 %v431, %v743
      %v745 = vpop.f32.mrf.mxu0
      %v746 = vadd.f32 %v431, %v745
      %747 = vmatmul.bf16.gmra.mxu0 %v622
      %v748 = vpop.f32.mrf.mxu0
      %v749 = vadd.f32 %v431, %v748
      %v750 = vpop.f32.mrf.mxu0
      %v751 = vadd.f32 %v431, %v750
      %752 = vmatmul.bf16.gmra.mxu0 %v625
      %v753 = vpop.f32.mrf.mxu0
      %v754 = vadd.f32 %v431, %v753
      %v755 = vpop.f32.mrf.mxu0
      %v756 = vadd.f32 %v431, %v755
      %757 = vmatmul.bf16.gmra.mxu0 %v628
      %v758 = vpop.f32.mrf.mxu0
      %v759 = vadd.f32 %v431, %v758
      %v760 = vpop.f32.mrf.mxu0
      %v761 = vadd.f32 %v431, %v760
      %762 = vmatmul.bf16.gmra.mxu0 %v631
      %v763 = vpop.f32.mrf.mxu0
      %v764 = vadd.f32 %v431, %v763
      %v765 = vpop.f32.mrf.mxu0
      %v766 = vadd.f32 %v431, %v765
      %767 = vmatmul.bf16.gmra.mxu0 %v634
      %v768 = vpop.f32.mrf.mxu0
      %v769 = vadd.f32 %v431, %v768
      %v770 = vpop.f32.mrf.mxu0
      %v771 = vadd.f32 %v431, %v770
      %772 = vmatmul.bf16.gmra.mxu0 %v637
      %v773 = vpop.f32.mrf.mxu0
      %v774 = vadd.f32 %v431, %v773
      %v775 = vpop.f32.mrf.mxu0
      %v776 = vadd.f32 %v431, %v775
      %777 = vmatmul.bf16.gmra.mxu0 %v640
      %v778 = vpop.f32.mrf.mxu0
      %v779 = vadd.f32 %v431, %v778
      %v780 = vpop.f32.mrf.mxu0
      %v781 = vadd.f32 %v431, %v780
      %782 = vmatmul.bf16.gmra.mxu0 %v643
      %v783 = vpop.f32.mrf.mxu0
      %v784 = vadd.f32 %v431, %v783
      %v785 = vpop.f32.mrf.mxu0
      %v786 = vadd.f32 %v431, %v785
      %787 = vmatmul.bf16.gmra.mxu0 %v646
      %v788 = vpop.f32.mrf.mxu0
      %v789 = vadd.f32 %v431, %v788
      %v790 = vpop.f32.mrf.mxu0
      %v791 = vadd.f32 %v431, %v790
      %792 = vmatmul.bf16.gmra.mxu0 %v649
      %v793 = vpop.f32.mrf.mxu0
      %v794 = vadd.f32 %v431, %v793
      %v795 = vpop.f32.mrf.mxu0
      %v796 = vadd.f32 %v431, %v795
      %797 = vmatmul.bf16.gmra.mxu0 %v652
      %v798 = vpop.f32.mrf.mxu0
      %v799 = vadd.f32 %v431, %v798
      %v800 = vpop.f32.mrf.mxu0
      %v801 = vadd.f32 %v431, %v800
      %802 = vmatmul.bf16.gmra.mxu0 %v655
      %v803 = vpop.f32.mrf.mxu0
      %v804 = vadd.f32 %v431, %v803
      %v805 = vpop.f32.mrf.mxu0
      %v806 = vadd.f32 %v431, %v805
      %807 = vmatmul.bf16.gmra.mxu0 %v658
      %v808 = vpop.f32.mrf.mxu0
      %v809 = vadd.f32 %v431, %v808
      %v810 = vpop.f32.mrf.mxu0
      %v811 = vadd.f32 %v431, %v810
      %812 = vmatmul.bf16.gmra.mxu0 %v661
      %v813 = vpop.f32.mrf.mxu0
      %v814 = vadd.f32 %v431, %v813
      %v815 = vpop.f32.mrf.mxu0
      %v816 = vadd.f32 %v431, %v815
      %817 = vmatmul.bf16.gmra.mxu0 %v664
      %v818 = vpop.f32.mrf.mxu0
      %v819 = vadd.f32 %v431, %v818
      %v820 = vpop.f32.mrf.mxu0
      %v821 = vadd.f32 %v431, %v820
      %822 = vmatmul.bf16.gmra.mxu0 %v667
      %v823 = vpop.f32.mrf.mxu0
      %v824 = vadd.f32 %v431, %v823
      %v825 = vpop.f32.mrf.mxu0
      %v826 = vadd.f32 %v431, %v825
      %827 = vmatmul.bf16.gmra.mxu0 %v670
      %v828 = vpop.f32.mrf.mxu0
      %v829 = vadd.f32 %v431, %v828
      %v830 = vpop.f32.mrf.mxu0
      %v831 = vadd.f32 %v431, %v830
      %832 = vmatmul.bf16.gmra.mxu0 %v673
      %v833 = vpop.f32.mrf.mxu0
      %v834 = vadd.f32 %v431, %v833
      %v835 = vpop.f32.mrf.mxu0
      %v836 = vadd.f32 %v431, %v835
      %837 = vmatmul.bf16.gmra.mxu0 %v676
      %v838 = vpop.f32.mrf.mxu0
      %v839 = vadd.f32 %v431, %v838
      %v840 = vpop.f32.mrf.mxu0
      %v841 = vadd.f32 %v431, %v840
      %842 = vmatmul.bf16.gmra.mxu0 %v679
      %v843 = vpop.f32.mrf.mxu0
      %v844 = vadd.f32 %v431, %v843
      %v845 = vpop.f32.mrf.mxu0
      %v846 = vadd.f32 %v431, %v845
      %847 = vmatmul.bf16.gmra.mxu0 %v682
      %v848 = vpop.f32.mrf.mxu0
      %v849 = vadd.f32 %v431, %v848
      %v850 = vpop.f32.mrf.mxu0
      %v851 = vadd.f32 %v431, %v850
      %852 = vmatmul.bf16.gmra.mxu0 %v685
      %v853 = vpop.f32.mrf.mxu0
      %v854 = vadd.f32 %v431, %v853
      %v855 = vpop.f32.mrf.mxu0
      %v856 = vadd.f32 %v431, %v855
      %857 = vmatmul.bf16.gmra.mxu0 %v688
      %v858 = vpop.f32.mrf.mxu0
      %v859 = vadd.f32 %v431, %v858
      %v860 = vpop.f32.mrf.mxu0
      %v861 = vadd.f32 %v431, %v860
      %862 = vdwg.mxu0
      %v863 = vpack.c.bf16 %v704, %v704
      %v864 = vpack.c.bf16 %v706, %v706
      %v865 = vpack.c.bf16 %v709, %v709
      %v866 = vpack.c.bf16 %v711, %v711
      %v867 = vpack.c.bf16 %v714, %v714
      %v868 = vpack.c.bf16 %v716, %v716
      %v869 = vpack.c.bf16 %v719, %v719
      %v870 = vpack.c.bf16 %v721, %v721
      %v871 = vpack.c.bf16 %v724, %v724
      %v872 = vpack.c.bf16 %v726, %v726
      %v873 = vpack.c.bf16 %v729, %v729
      %v874 = vpack.c.bf16 %v731, %v731
      %v875 = vpack.c.bf16 %v734, %v734
      %v876 = vpack.c.bf16 %v736, %v736
      %v877 = vpack.c.bf16 %v739, %v739
      %v878 = vpack.c.bf16 %v741, %v741
      %v879 = vpack.c.bf16 %v744, %v744
      %v880 = vpack.c.bf16 %v746, %v746
      %v881 = vpack.c.bf16 %v749, %v749
      %v882 = vpack.c.bf16 %v751, %v751
      %v883 = vpack.c.bf16 %v754, %v754
      %v884 = vpack.c.bf16 %v756, %v756
      %v885 = vpack.c.bf16 %v759, %v759
      %v886 = vpack.c.bf16 %v761, %v761
      %v887 = vpack.c.bf16 %v764, %v764
      %v888 = vpack.c.bf16 %v766, %v766
      %v889 = vpack.c.bf16 %v769, %v769
      %v890 = vpack.c.bf16 %v771, %v771
      %v891 = vpack.c.bf16 %v774, %v774
      %v892 = vpack.c.bf16 %v776, %v776
      %v893 = vpack.c.bf16 %v779, %v779
      %v894 = vpack.c.bf16 %v781, %v781
      %v895 = vpack.c.bf16 %v784, %v784
      %v896 = vpack.c.bf16 %v786, %v786
      %v897 = vpack.c.bf16 %v789, %v789
      %v898 = vpack.c.bf16 %v791, %v791
      %v899 = vpack.c.bf16 %v794, %v794
      %v900 = vpack.c.bf16 %v796, %v796
      %v901 = vpack.c.bf16 %v799, %v799
      %v902 = vpack.c.bf16 %v801, %v801
      %v903 = vpack.c.bf16 %v804, %v804
      %v904 = vpack.c.bf16 %v806, %v806
      %v905 = vpack.c.bf16 %v809, %v809
      %v906 = vpack.c.bf16 %v811, %v811
      %v907 = vpack.c.bf16 %v814, %v814
      %v908 = vpack.c.bf16 %v816, %v816
      %v909 = vpack.c.bf16 %v819, %v819
      %v910 = vpack.c.bf16 %v821, %v821
      %v911 = vpack.c.bf16 %v824, %v824
      %v912 = vpack.c.bf16 %v826, %v826
      %v913 = vpack.c.bf16 %v829, %v829
      %v914 = vpack.c.bf16 %v831, %v831
      %v915 = vpack.c.bf16 %v834, %v834
      %v916 = vpack.c.bf16 %v836, %v836
      %v917 = vpack.c.bf16 %v839, %v839
      %v918 = vpack.c.bf16 %v841, %v841
      %v919 = vpack.c.bf16 %v844, %v844
      %v920 = vpack.c.bf16 %v846, %v846
      %v921 = vpack.c.bf16 %v849, %v849
      %v922 = vpack.c.bf16 %v851, %v851
      %v923 = vpack.c.bf16 %v854, %v854
      %v924 = vpack.c.bf16 %v856, %v856
      %v925 = vpack.c.bf16 %v859, %v859
      %v926 = vpack.c.bf16 %v861, %v861
      %vm927 = vcmask 60416
      %928 = vst.msk [vmem:[%s349] sm:$0xf] %vm927, %v863
      %929 = vst.msk [vmem:[%s349 + $0x4] sm:$0xf] %vm927, %v864
      %930 = vst.msk [vmem:[%s349 + $0x8] sm:$0xf] %vm927, %v865
      %931 = vst.msk [vmem:[%s349 + $0xc] sm:$0xf] %vm927, %v866
      %932 = vst.msk [vmem:[%s349 + $0x10] sm:$0xf] %vm927, %v867
      %933 = vst.msk [vmem:[%s349 + $0x14] sm:$0xf] %vm927, %v868
      %934 = vst.msk [vmem:[%s349 + $0x18] sm:$0xf] %vm927, %v869
      %935 = vst.msk [vmem:[%s349 + $0x1c] sm:$0xf] %vm927, %v870
      %936 = vst.msk [vmem:[%s349 + $0x20] sm:$0xf] %vm927, %v871
      %937 = vst.msk [vmem:[%s349 + $0x24] sm:$0xf] %vm927, %v872
      %938 = vst.msk [vmem:[%s349 + $0x28] sm:$0xf] %vm927, %v873
      %939 = vst.msk [vmem:[%s349 + $0x2c] sm:$0xf] %vm927, %v874
      %940 = vst.msk [vmem:[%s349 + $0x30] sm:$0xf] %vm927, %v875
      %941 = vst.msk [vmem:[%s349 + $0x34] sm:$0xf] %vm927, %v876
      %942 = vst.msk [vmem:[%s349 + $0x38] sm:$0xf] %vm927, %v877
      %943 = vst.msk [vmem:[%s349 + $0x3c] sm:$0xf] %vm927, %v878
      %944 = vst.msk [vmem:[%s349 + $0x40] sm:$0xf] %vm927, %v879
      %945 = vst.msk [vmem:[%s349 + $0x44] sm:$0xf] %vm927, %v880
      %946 = vst.msk [vmem:[%s349 + $0x48] sm:$0xf] %vm927, %v881
      %947 = vst.msk [vmem:[%s349 + $0x4c] sm:$0xf] %vm927, %v882
      %948 = vst.msk [vmem:[%s349 + $0x50] sm:$0xf] %vm927, %v883
      %949 = vst.msk [vmem:[%s349 + $0x54] sm:$0xf] %vm927, %v884
      %950 = vst.msk [vmem:[%s349 + $0x58] sm:$0xf] %vm927, %v885
      %951 = vst.msk [vmem:[%s349 + $0x5c] sm:$0xf] %vm927, %v886
      %952 = vst.msk [vmem:[%s349 + $0x60] sm:$0xf] %vm927, %v887
      %953 = vst.msk [vmem:[%s349 + $0x64] sm:$0xf] %vm927, %v888
      %954 = vst.msk [vmem:[%s349 + $0x68] sm:$0xf] %vm927, %v889
      %955 = vst.msk [vmem:[%s349 + $0x6c] sm:$0xf] %vm927, %v890
      %956 = vst.msk [vmem:[%s349 + $0x70] sm:$0xf] %vm927, %v891
      %957 = vst.msk [vmem:[%s349 + $0x74] sm:$0xf] %vm927, %v892
      %958 = vst.msk [vmem:[%s349 + $0x78] sm:$0xf] %vm927, %v893
      %959 = vst.msk [vmem:[%s349 + $0x7c] sm:$0xf] %vm927, %v894
      %960 = vst.msk [vmem:[%s349 + $0x80] sm:$0xf] %vm927, %v895
      %961 = vst.msk [vmem:[%s349 + $0x84] sm:$0xf] %vm927, %v896
      %962 = vst.msk [vmem:[%s349 + $0x88] sm:$0xf] %vm927, %v897
      %963 = vst.msk [vmem:[%s349 + $0x8c] sm:$0xf] %vm927, %v898
      %964 = vst.msk [vmem:[%s349 + $0x90] sm:$0xf] %vm927, %v899
      %965 = vst.msk [vmem:[%s349 + $0x94] sm:$0xf] %vm927, %v900
      %966 = vst.msk [vmem:[%s349 + $0x98] sm:$0xf] %vm927, %v901
      %967 = vst.msk [vmem:[%s349 + $0x9c] sm:$0xf] %vm927, %v902
      %968 = vst.msk [vmem:[%s349 + $0xa0] sm:$0xf] %vm927, %v903
      %969 = vst.msk [vmem:[%s349 + $0xa4] sm:$0xf] %vm927, %v904
      %970 = vst.msk [vmem:[%s349 + $0xa8] sm:$0xf] %vm927, %v905
      %971 = vst.msk [vmem:[%s349 + $0xac] sm:$0xf] %vm927, %v906
      %972 = vst.msk [vmem:[%s349 + $0xb0] sm:$0xf] %vm927, %v907
      %973 = vst.msk [vmem:[%s349 + $0xb4] sm:$0xf] %vm927, %v908
      %974 = vst.msk [vmem:[%s349 + $0xb8] sm:$0xf] %vm927, %v909
      %975 = vst.msk [vmem:[%s349 + $0xbc] sm:$0xf] %vm927, %v910
      %976 = vst.msk [vmem:[%s349 + $0xc0] sm:$0xf] %vm927, %v911
      %977 = vst.msk [vmem:[%s349 + $0xc4] sm:$0xf] %vm927, %v912
      %978 = vst.msk [vmem:[%s349 + $0xc8] sm:$0xf] %vm927, %v913
      %979 = vst.msk [vmem:[%s349 + $0xcc] sm:$0xf] %vm927, %v914
      %980 = vst.msk [vmem:[%s349 + $0xd0] sm:$0xf] %vm927, %v915
      %981 = vst.msk [vmem:[%s349 + $0xd4] sm:$0xf] %vm927, %v916
      %982 = vst.msk [vmem:[%s349 + $0xd8] sm:$0xf] %vm927, %v917
      %983 = vst.msk [vmem:[%s349 + $0xdc] sm:$0xf] %vm927, %v918
      %984 = vst.msk [vmem:[%s349 + $0xe0] sm:$0xf] %vm927, %v919
      %985 = vst.msk [vmem:[%s349 + $0xe4] sm:$0xf] %vm927, %v920
      %986 = vst.msk [vmem:[%s349 + $0xe8] sm:$0xf] %vm927, %v921
      %987 = vst.msk [vmem:[%s349 + $0xec] sm:$0xf] %vm927, %v922
      %988 = vst.msk [vmem:[%s349 + $0xf0] sm:$0xf] %vm927, %v923
      %989 = vst.msk [vmem:[%s349 + $0xf4] sm:$0xf] %vm927, %v924
      %990 = vst.msk [vmem:[%s349 + $0xf8] sm:$0xf] %vm927, %v925
      %991 = vst.msk [vmem:[%s349 + $0xfc] sm:$0xf] %vm927, %v926
      %v992 = vld [vmem:[%s2] sm:$0xf]
      %v993 = vld [vmem:[%s5] sm:$0x1]
      %v995 = vperm.slane %v993, 0
      %v998 = vsel %vm690, %v992, 0
      %1000 = vmatpush.bf16.msra.mxu0 0
      %1001 = vmatpush.bf16.msra.mxu0 0
      %1002 = vmatpush.bf16.msra.mxu0 0
      %1003 = vmatpush.bf16.msra.mxu0 0
      %1004 = vmatpush.bf16.msra.mxu0 0
      %1005 = vmatpush.bf16.msra.mxu0 0
      %1006 = vmatpush.bf16.msra.mxu0 0
      %1007 = vmatpush.bf16.msra.mxu0 %v998
      %1008 = vmatmul.bf16.gmra.mxu0 %v595
      %v1009 = vpop.f32.mrf.mxu0
      %v1010 = vadd.f32 %v995, %v1009
      %v1011 = vpop.f32.mrf.mxu0
      %v1012 = vadd.f32 %v995, %v1011
      %1013 = vmatmul.bf16.gmra.mxu0 %v598
      %v1014 = vpop.f32.mrf.mxu0
      %v1015 = vadd.f32 %v995, %v1014
      %v1016 = vpop.f32.mrf.mxu0
      %v1017 = vadd.f32 %v995, %v1016
      %1018 = vmatmul.bf16.gmra.mxu0 %v601
      %v1019 = vpop.f32.mrf.mxu0
      %v1020 = vadd.f32 %v995, %v1019
      %v1021 = vpop.f32.mrf.mxu0
      %v1022 = vadd.f32 %v995, %v1021
      %1023 = vmatmul.bf16.gmra.mxu0 %v604
      %v1024 = vpop.f32.mrf.mxu0
      %v1025 = vadd.f32 %v995, %v1024
      %v1026 = vpop.f32.mrf.mxu0
      %v1027 = vadd.f32 %v995, %v1026
      %1028 = vmatmul.bf16.gmra.mxu0 %v607
      %v1029 = vpop.f32.mrf.mxu0
      %v1030 = vadd.f32 %v995, %v1029
      %v1031 = vpop.f32.mrf.mxu0
      %v1032 = vadd.f32 %v995, %v1031
      %1033 = vmatmul.bf16.gmra.mxu0 %v610
      %v1034 = vpop.f32.mrf.mxu0
      %v1035 = vadd.f32 %v995, %v1034
      %v1036 = vpop.f32.mrf.mxu0
      %v1037 = vadd.f32 %v995, %v1036
      %1038 = vmatmul.bf16.gmra.mxu0 %v613
      %v1039 = vpop.f32.mrf.mxu0
      %v1040 = vadd.f32 %v995, %v1039
      %v1041 = vpop.f32.mrf.mxu0
      %v1042 = vadd.f32 %v995, %v1041
      %1043 = vmatmul.bf16.gmra.mxu0 %v616
      %v1044 = vpop.f32.mrf.mxu0
      %v1045 = vadd.f32 %v995, %v1044
      %v1046 = vpop.f32.mrf.mxu0
      %v1047 = vadd.f32 %v995, %v1046
      %1048 = vmatmul.bf16.gmra.mxu0 %v619
      %v1049 = vpop.f32.mrf.mxu0
      %v1050 = vadd.f32 %v995, %v1049
      %v1051 = vpop.f32.mrf.mxu0
      %v1052 = vadd.f32 %v995, %v1051
      %1053 = vmatmul.bf16.gmra.mxu0 %v622
      %v1054 = vpop.f32.mrf.mxu0
      %v1055 = vadd.f32 %v995, %v1054
      %v1056 = vpop.f32.mrf.mxu0
      %v1057 = vadd.f32 %v995, %v1056
      %1058 = vmatmul.bf16.gmra.mxu0 %v625
      %v1059 = vpop.f32.mrf.mxu0
      %v1060 = vadd.f32 %v995, %v1059
      %v1061 = vpop.f32.mrf.mxu0
      %v1062 = vadd.f32 %v995, %v1061
      %1063 = vmatmul.bf16.gmra.mxu0 %v628
      %v1064 = vpop.f32.mrf.mxu0
      %v1065 = vadd.f32 %v995, %v1064
      %v1066 = vpop.f32.mrf.mxu0
      %v1067 = vadd.f32 %v995, %v1066
      %1068 = vmatmul.bf16.gmra.mxu0 %v631
      %v1069 = vpop.f32.mrf.mxu0
      %v1070 = vadd.f32 %v995, %v1069
      %v1071 = vpop.f32.mrf.mxu0
      %v1072 = vadd.f32 %v995, %v1071
      %1073 = vmatmul.bf16.gmra.mxu0 %v634
      %v1074 = vpop.f32.mrf.mxu0
      %v1075 = vadd.f32 %v995, %v1074
      %v1076 = vpop.f32.mrf.mxu0
      %v1077 = vadd.f32 %v995, %v1076
      %1078 = vmatmul.bf16.gmra.mxu0 %v637
      %v1079 = vpop.f32.mrf.mxu0
      %v1080 = vadd.f32 %v995, %v1079
      %v1081 = vpop.f32.mrf.mxu0
      %v1082 = vadd.f32 %v995, %v1081
      %1083 = vmatmul.bf16.gmra.mxu0 %v640
      %v1084 = vpop.f32.mrf.mxu0
      %v1085 = vadd.f32 %v995, %v1084
      %v1086 = vpop.f32.mrf.mxu0
      %v1087 = vadd.f32 %v995, %v1086
      %1088 = vmatmul.bf16.gmra.mxu0 %v643
      %v1089 = vpop.f32.mrf.mxu0
      %v1090 = vadd.f32 %v995, %v1089
      %v1091 = vpop.f32.mrf.mxu0
      %v1092 = vadd.f32 %v995, %v1091
      %1093 = vmatmul.bf16.gmra.mxu0 %v646
      %v1094 = vpop.f32.mrf.mxu0
      %v1095 = vadd.f32 %v995, %v1094
      %v1096 = vpop.f32.mrf.mxu0
      %v1097 = vadd.f32 %v995, %v1096
      %1098 = vmatmul.bf16.gmra.mxu0 %v649
      %v1099 = vpop.f32.mrf.mxu0
      %v1100 = vadd.f32 %v995, %v1099
      %v1101 = vpop.f32.mrf.mxu0
      %v1102 = vadd.f32 %v995, %v1101
      %1103 = vmatmul.bf16.gmra.mxu0 %v652
      %v1104 = vpop.f32.mrf.mxu0
      %v1105 = vadd.f32 %v995, %v1104
      %v1106 = vpop.f32.mrf.mxu0
      %v1107 = vadd.f32 %v995, %v1106
      %1108 = vmatmul.bf16.gmra.mxu0 %v655
      %v1109 = vpop.f32.mrf.mxu0
      %v1110 = vadd.f32 %v995, %v1109
      %v1111 = vpop.f32.mrf.mxu0
      %v1112 = vadd.f32 %v995, %v1111
      %1113 = vmatmul.bf16.gmra.mxu0 %v658
      %v1114 = vpop.f32.mrf.mxu0
      %v1115 = vadd.f32 %v995, %v1114
      %v1116 = vpop.f32.mrf.mxu0
      %v1117 = vadd.f32 %v995, %v1116
      %1118 = vmatmul.bf16.gmra.mxu0 %v661
      %v1119 = vpop.f32.mrf.mxu0
      %v1120 = vadd.f32 %v995, %v1119
      %v1121 = vpop.f32.mrf.mxu0
      %v1122 = vadd.f32 %v995, %v1121
      %1123 = vmatmul.bf16.gmra.mxu0 %v664
      %v1124 = vpop.f32.mrf.mxu0
      %v1125 = vadd.f32 %v995, %v1124
      %v1126 = vpop.f32.mrf.mxu0
      %v1127 = vadd.f32 %v995, %v1126
      %1128 = vmatmul.bf16.gmra.mxu0 %v667
      %v1129 = vpop.f32.mrf.mxu0
      %v1130 = vadd.f32 %v995, %v1129
      %v1131 = vpop.f32.mrf.mxu0
      %v1132 = vadd.f32 %v995, %v1131
      %1133 = vmatmul.bf16.gmra.mxu0 %v670
      %v1134 = vpop.f32.mrf.mxu0
      %v1135 = vadd.f32 %v995, %v1134
      %v1136 = vpop.f32.mrf.mxu0
      %v1137 = vadd.f32 %v995, %v1136
      %1138 = vmatmul.bf16.gmra.mxu0 %v673
      %v1139 = vpop.f32.mrf.mxu0
      %v1140 = vadd.f32 %v995, %v1139
      %v1141 = vpop.f32.mrf.mxu0
      %v1142 = vadd.f32 %v995, %v1141
      %1143 = vmatmul.bf16.gmra.mxu0 %v676
      %v1144 = vpop.f32.mrf.mxu0
      %v1145 = vadd.f32 %v995, %v1144
      %v1146 = vpop.f32.mrf.mxu0
      %v1147 = vadd.f32 %v995, %v1146
      %1148 = vmatmul.bf16.gmra.mxu0 %v679
      %v1149 = vpop.f32.mrf.mxu0
      %v1150 = vadd.f32 %v995, %v1149
      %v1151 = vpop.f32.mrf.mxu0
      %v1152 = vadd.f32 %v995, %v1151
      %1153 = vmatmul.bf16.gmra.mxu0 %v682
      %v1154 = vpop.f32.mrf.mxu0
      %v1155 = vadd.f32 %v995, %v1154
      %v1156 = vpop.f32.mrf.mxu0
      %v1157 = vadd.f32 %v995, %v1156
      %1158 = vmatmul.bf16.gmra.mxu0 %v685
      %v1159 = vpop.f32.mrf.mxu0
      %v1160 = vadd.f32 %v995, %v1159
      %v1161 = vpop.f32.mrf.mxu0
      %v1162 = vadd.f32 %v995, %v1161
      %1163 = vmatmul.bf16.gmra.mxu0 %v688
      %v1164 = vpop.f32.mrf.mxu0
      %v1165 = vadd.f32 %v995, %v1164
      %v1166 = vpop.f32.mrf.mxu0
      %v1167 = vadd.f32 %v995, %v1166
      %1168 = vdwg.mxu0
      %v1169 = vpack.c.bf16 %v1010, %v1010
      %v1170 = vpack.c.bf16 %v1012, %v1012
      %v1171 = vpack.c.bf16 %v1015, %v1015
      %v1172 = vpack.c.bf16 %v1017, %v1017
      %v1173 = vpack.c.bf16 %v1020, %v1020
      %v1174 = vpack.c.bf16 %v1022, %v1022
      %v1175 = vpack.c.bf16 %v1025, %v1025
      %v1176 = vpack.c.bf16 %v1027, %v1027
      %v1177 = vpack.c.bf16 %v1030, %v1030
      %v1178 = vpack.c.bf16 %v1032, %v1032
      %v1179 = vpack.c.bf16 %v1035, %v1035
      %v1180 = vpack.c.bf16 %v1037, %v1037
      %v1181 = vpack.c.bf16 %v1040, %v1040
      %v1182 = vpack.c.bf16 %v1042, %v1042
      %v1183 = vpack.c.bf16 %v1045, %v1045
      %v1184 = vpack.c.bf16 %v1047, %v1047
      %v1185 = vpack.c.bf16 %v1050, %v1050
      %v1186 = vpack.c.bf16 %v1052, %v1052
      %v1187 = vpack.c.bf16 %v1055, %v1055
      %v1188 = vpack.c.bf16 %v1057, %v1057
      %v1189 = vpack.c.bf16 %v1060, %v1060
      %v1190 = vpack.c.bf16 %v1062, %v1062
      %v1191 = vpack.c.bf16 %v1065, %v1065
      %v1192 = vpack.c.bf16 %v1067, %v1067
      %v1193 = vpack.c.bf16 %v1070, %v1070
      %v1194 = vpack.c.bf16 %v1072, %v1072
      %v1195 = vpack.c.bf16 %v1075, %v1075
      %v1196 = vpack.c.bf16 %v1077, %v1077
      %v1197 = vpack.c.bf16 %v1080, %v1080
      %v1198 = vpack.c.bf16 %v1082, %v1082
      %v1199 = vpack.c.bf16 %v1085, %v1085
      %v1200 = vpack.c.bf16 %v1087, %v1087
      %v1201 = vpack.c.bf16 %v1090, %v1090
      %v1202 = vpack.c.bf16 %v1092, %v1092
      %v1203 = vpack.c.bf16 %v1095, %v1095
      %v1204 = vpack.c.bf16 %v1097, %v1097
      %v1205 = vpack.c.bf16 %v1100, %v1100
      %v1206 = vpack.c.bf16 %v1102, %v1102
      %v1207 = vpack.c.bf16 %v1105, %v1105
      %v1208 = vpack.c.bf16 %v1107, %v1107
      %v1209 = vpack.c.bf16 %v1110, %v1110
      %v1210 = vpack.c.bf16 %v1112, %v1112
      %v1211 = vpack.c.bf16 %v1115, %v1115
      %v1212 = vpack.c.bf16 %v1117, %v1117
      %v1213 = vpack.c.bf16 %v1120, %v1120
      %v1214 = vpack.c.bf16 %v1122, %v1122
      %v1215 = vpack.c.bf16 %v1125, %v1125
      %v1216 = vpack.c.bf16 %v1127, %v1127
      %v1217 = vpack.c.bf16 %v1130, %v1130
      %v1218 = vpack.c.bf16 %v1132, %v1132
      %v1219 = vpack.c.bf16 %v1135, %v1135
      %v1220 = vpack.c.bf16 %v1137, %v1137
      %v1221 = vpack.c.bf16 %v1140, %v1140
      %v1222 = vpack.c.bf16 %v1142, %v1142
      %v1223 = vpack.c.bf16 %v1145, %v1145
      %v1224 = vpack.c.bf16 %v1147, %v1147
      %v1225 = vpack.c.bf16 %v1150, %v1150
      %v1226 = vpack.c.bf16 %v1152, %v1152
      %v1227 = vpack.c.bf16 %v1155, %v1155
      %v1228 = vpack.c.bf16 %v1157, %v1157
      %v1229 = vpack.c.bf16 %v1160, %v1160
      %v1230 = vpack.c.bf16 %v1162, %v1162
      %v1231 = vpack.c.bf16 %v1165, %v1165
      %v1232 = vpack.c.bf16 %v1167, %v1167
      %1233 = vst.msk [vmem:[%s355] sm:$0xf] %vm927, %v1169
      %1234 = vst.msk [vmem:[%s355 + $0x4] sm:$0xf] %vm927, %v1170
      %1235 = vst.msk [vmem:[%s355 + $0x8] sm:$0xf] %vm927, %v1171
      %1236 = vst.msk [vmem:[%s355 + $0xc] sm:$0xf] %vm927, %v1172
      %1237 = vst.msk [vmem:[%s355 + $0x10] sm:$0xf] %vm927, %v1173
      %1238 = vst.msk [vmem:[%s355 + $0x14] sm:$0xf] %vm927, %v1174
      %1239 = vst.msk [vmem:[%s355 + $0x18] sm:$0xf] %vm927, %v1175
      %1240 = vst.msk [vmem:[%s355 + $0x1c] sm:$0xf] %vm927, %v1176
      %1241 = vst.msk [vmem:[%s355 + $0x20] sm:$0xf] %vm927, %v1177
      %1242 = vst.msk [vmem:[%s355 + $0x24] sm:$0xf] %vm927, %v1178
      %1243 = vst.msk [vmem:[%s355 + $0x28] sm:$0xf] %vm927, %v1179
      %1244 = vst.msk [vmem:[%s355 + $0x2c] sm:$0xf] %vm927, %v1180
      %1245 = vst.msk [vmem:[%s355 + $0x30] sm:$0xf] %vm927, %v1181
      %1246 = vst.msk [vmem:[%s355 + $0x34] sm:$0xf] %vm927, %v1182
      %1247 = vst.msk [vmem:[%s355 + $0x38] sm:$0xf] %vm927, %v1183
      %1248 = vst.msk [vmem:[%s355 + $0x3c] sm:$0xf] %vm927, %v1184
      %1249 = vst.msk [vmem:[%s355 + $0x40] sm:$0xf] %vm927, %v1185
      %1250 = vst.msk [vmem:[%s355 + $0x44] sm:$0xf] %vm927, %v1186
      %1251 = vst.msk [vmem:[%s355 + $0x48] sm:$0xf] %vm927, %v1187
      %1252 = vst.msk [vmem:[%s355 + $0x4c] sm:$0xf] %vm927, %v1188
      %1253 = vst.msk [vmem:[%s355 + $0x50] sm:$0xf] %vm927, %v1189
      %1254 = vst.msk [vmem:[%s355 + $0x54] sm:$0xf] %vm927, %v1190
      %1255 = vst.msk [vmem:[%s355 + $0x58] sm:$0xf] %vm927, %v1191
      %1256 = vst.msk [vmem:[%s355 + $0x5c] sm:$0xf] %vm927, %v1192
      %1257 = vst.msk [vmem:[%s355 + $0x60] sm:$0xf] %vm927, %v1193
      %1258 = vst.msk [vmem:[%s355 + $0x64] sm:$0xf] %vm927, %v1194
      %1259 = vst.msk [vmem:[%s355 + $0x68] sm:$0xf] %vm927, %v1195
      %1260 = vst.msk [vmem:[%s355 + $0x6c] sm:$0xf] %vm927, %v1196
      %1261 = vst.msk [vmem:[%s355 + $0x70] sm:$0xf] %vm927, %v1197
      %1262 = vst.msk [vmem:[%s355 + $0x74] sm:$0xf] %vm927, %v1198
      %1263 = vst.msk [vmem:[%s355 + $0x78] sm:$0xf] %vm927, %v1199
      %1264 = vst.msk [vmem:[%s355 + $0x7c] sm:$0xf] %vm927, %v1200
      %1265 = vst.msk [vmem:[%s355 + $0x80] sm:$0xf] %vm927, %v1201
      %1266 = vst.msk [vmem:[%s355 + $0x84] sm:$0xf] %vm927, %v1202
      %1267 = vst.msk [vmem:[%s355 + $0x88] sm:$0xf] %vm927, %v1203
      %1268 = vst.msk [vmem:[%s355 + $0x8c] sm:$0xf] %vm927, %v1204
      %1269 = vst.msk [vmem:[%s355 + $0x90] sm:$0xf] %vm927, %v1205
      %1270 = vst.msk [vmem:[%s355 + $0x94] sm:$0xf] %vm927, %v1206
      %1271 = vst.msk [vmem:[%s355 + $0x98] sm:$0xf] %vm927, %v1207
      %1272 = vst.msk [vmem:[%s355 + $0x9c] sm:$0xf] %vm927, %v1208
      %1273 = vst.msk [vmem:[%s355 + $0xa0] sm:$0xf] %vm927, %v1209
      %1274 = vst.msk [vmem:[%s355 + $0xa4] sm:$0xf] %vm927, %v1210
      %1275 = vst.msk [vmem:[%s355 + $0xa8] sm:$0xf] %vm927, %v1211
      %1276 = vst.msk [vmem:[%s355 + $0xac] sm:$0xf] %vm927, %v1212
      %1277 = vst.msk [vmem:[%s355 + $0xb0] sm:$0xf] %vm927, %v1213
      %1278 = vst.msk [vmem:[%s355 + $0xb4] sm:$0xf] %vm927, %v1214
      %1279 = vst.msk [vmem:[%s355 + $0xb8] sm:$0xf] %vm927, %v1215
      %1280 = vst.msk [vmem:[%s355 + $0xbc] sm:$0xf] %vm927, %v1216
      %1281 = vst.msk [vmem:[%s355 + $0xc0] sm:$0xf] %vm927, %v1217
      %1282 = vst.msk [vmem:[%s355 + $0xc4] sm:$0xf] %vm927, %v1218
      %1283 = vst.msk [vmem:[%s355 + $0xc8] sm:$0xf] %vm927, %v1219
      %1284 = vst.msk [vmem:[%s355 + $0xcc] sm:$0xf] %vm927, %v1220
      %1285 = vst.msk [vmem:[%s355 + $0xd0] sm:$0xf] %vm927, %v1221
      %1286 = vst.msk [vmem:[%s355 + $0xd4] sm:$0xf] %vm927, %v1222
      %1287 = vst.msk [vmem:[%s355 + $0xd8] sm:$0xf] %vm927, %v1223
      %1288 = vst.msk [vmem:[%s355 + $0xdc] sm:$0xf] %vm927, %v1224
      %1289 = vst.msk [vmem:[%s355 + $0xe0] sm:$0xf] %vm927, %v1225
      %1290 = vst.msk [vmem:[%s355 + $0xe4] sm:$0xf] %vm927, %v1226
      %1291 = vst.msk [vmem:[%s355 + $0xe8] sm:$0xf] %vm927, %v1227
      %1292 = vst.msk [vmem:[%s355 + $0xec] sm:$0xf] %vm927, %v1228
      %1293 = vst.msk [vmem:[%s355 + $0xf0] sm:$0xf] %vm927, %v1229
      %1294 = vst.msk [vmem:[%s355 + $0xf4] sm:$0xf] %vm927, %v1230
      %1295 = vst.msk [vmem:[%s355 + $0xf8] sm:$0xf] %vm927, %v1231
      %1296 = vst.msk [vmem:[%s355 + $0xfc] sm:$0xf] %vm927, %v1232
      %v1297 = vld [vmem:[%s3] sm:$0xf]
      %v1298 = vld [vmem:[%s6] sm:$0x1]
      %v1300 = vperm.slane %v1298, 0
      %v1303 = vsel %vm690, %v1297, 0
      %1305 = vmatpush.bf16.msra.mxu0 0
      %1306 = vmatpush.bf16.msra.mxu0 0
      %1307 = vmatpush.bf16.msra.mxu0 0
      %1308 = vmatpush.bf16.msra.mxu0 0
      %1309 = vmatpush.bf16.msra.mxu0 0
      %1310 = vmatpush.bf16.msra.mxu0 0
      %1311 = vmatpush.bf16.msra.mxu0 0
      %1312 = vmatpush.bf16.msra.mxu0 %v1303
      %1313 = vmatmul.bf16.gmra.mxu0 %v595
      %v1314 = vpop.f32.mrf.mxu0
      %v1315 = vadd.f32 %v1300, %v1314
      %v1316 = vpop.f32.mrf.mxu0
      %v1317 = vadd.f32 %v1300, %v1316
      %1318 = vmatmul.bf16.gmra.mxu0 %v598
      %v1319 = vpop.f32.mrf.mxu0
      %v1320 = vadd.f32 %v1300, %v1319
      %v1321 = vpop.f32.mrf.mxu0
      %v1322 = vadd.f32 %v1300, %v1321
      %1323 = vmatmul.bf16.gmra.mxu0 %v601
      %v1324 = vpop.f32.mrf.mxu0
      %v1325 = vadd.f32 %v1300, %v1324
      %v1326 = vpop.f32.mrf.mxu0
      %v1327 = vadd.f32 %v1300, %v1326
      %1328 = vmatmul.bf16.gmra.mxu0 %v604
      %v1329 = vpop.f32.mrf.mxu0
      %v1330 = vadd.f32 %v1300, %v1329
      %v1331 = vpop.f32.mrf.mxu0
      %v1332 = vadd.f32 %v1300, %v1331
      %1333 = vmatmul.bf16.gmra.mxu0 %v607
      %v1334 = vpop.f32.mrf.mxu0
      %v1335 = vadd.f32 %v1300, %v1334
      %v1336 = vpop.f32.mrf.mxu0
      %v1337 = vadd.f32 %v1300, %v1336
      %1338 = vmatmul.bf16.gmra.mxu0 %v610
      %v1339 = vpop.f32.mrf.mxu0
      %v1340 = vadd.f32 %v1300, %v1339
      %v1341 = vpop.f32.mrf.mxu0
      %v1342 = vadd.f32 %v1300, %v1341
      %1343 = vmatmul.bf16.gmra.mxu0 %v613
      %v1344 = vpop.f32.mrf.mxu0
      %v1345 = vadd.f32 %v1300, %v1344
      %v1346 = vpop.f32.mrf.mxu0
      %v1347 = vadd.f32 %v1300, %v1346
      %1348 = vmatmul.bf16.gmra.mxu0 %v616
      %v1349 = vpop.f32.mrf.mxu0
      %v1350 = vadd.f32 %v1300, %v1349
      %v1351 = vpop.f32.mrf.mxu0
      %v1352 = vadd.f32 %v1300, %v1351
      %1353 = vmatmul.bf16.gmra.mxu0 %v619
      %v1354 = vpop.f32.mrf.mxu0
      %v1355 = vadd.f32 %v1300, %v1354
      %v1356 = vpop.f32.mrf.mxu0
      %v1357 = vadd.f32 %v1300, %v1356
      %1358 = vmatmul.bf16.gmra.mxu0 %v622
      %v1359 = vpop.f32.mrf.mxu0
      %v1360 = vadd.f32 %v1300, %v1359
      %v1361 = vpop.f32.mrf.mxu0
      %v1362 = vadd.f32 %v1300, %v1361
      %1363 = vmatmul.bf16.gmra.mxu0 %v625
      %v1364 = vpop.f32.mrf.mxu0
      %v1365 = vadd.f32 %v1300, %v1364
      %v1366 = vpop.f32.mrf.mxu0
      %v1367 = vadd.f32 %v1300, %v1366
      %1368 = vmatmul.bf16.gmra.mxu0 %v628
      %v1369 = vpop.f32.mrf.mxu0
      %v1370 = vadd.f32 %v1300, %v1369
      %v1371 = vpop.f32.mrf.mxu0
      %v1372 = vadd.f32 %v1300, %v1371
      %1373 = vmatmul.bf16.gmra.mxu0 %v631
      %v1374 = vpop.f32.mrf.mxu0
      %v1375 = vadd.f32 %v1300, %v1374
      %v1376 = vpop.f32.mrf.mxu0
      %v1377 = vadd.f32 %v1300, %v1376
      %1378 = vmatmul.bf16.gmra.mxu0 %v634
      %v1379 = vpop.f32.mrf.mxu0
      %v1380 = vadd.f32 %v1300, %v1379
      %v1381 = vpop.f32.mrf.mxu0
      %v1382 = vadd.f32 %v1300, %v1381
      %1383 = vmatmul.bf16.gmra.mxu0 %v637
      %v1384 = vpop.f32.mrf.mxu0
      %v1385 = vadd.f32 %v1300, %v1384
      %v1386 = vpop.f32.mrf.mxu0
      %v1387 = vadd.f32 %v1300, %v1386
      %1388 = vmatmul.bf16.gmra.mxu0 %v640
      %v1389 = vpop.f32.mrf.mxu0
      %v1390 = vadd.f32 %v1300, %v1389
      %v1391 = vpop.f32.mrf.mxu0
      %v1392 = vadd.f32 %v1300, %v1391
      %1393 = vmatmul.bf16.gmra.mxu0 %v643
      %v1394 = vpop.f32.mrf.mxu0
      %v1395 = vadd.f32 %v1300, %v1394
      %v1396 = vpop.f32.mrf.mxu0
      %v1397 = vadd.f32 %v1300, %v1396
      %1398 = vmatmul.bf16.gmra.mxu0 %v646
      %v1399 = vpop.f32.mrf.mxu0
      %v1400 = vadd.f32 %v1300, %v1399
      %v1401 = vpop.f32.mrf.mxu0
      %v1402 = vadd.f32 %v1300, %v1401
      %1403 = vmatmul.bf16.gmra.mxu0 %v649
      %v1404 = vpop.f32.mrf.mxu0
      %v1405 = vadd.f32 %v1300, %v1404
      %v1406 = vpop.f32.mrf.mxu0
      %v1407 = vadd.f32 %v1300, %v1406
      %1408 = vmatmul.bf16.gmra.mxu0 %v652
      %v1409 = vpop.f32.mrf.mxu0
      %v1410 = vadd.f32 %v1300, %v1409
      %v1411 = vpop.f32.mrf.mxu0
      %v1412 = vadd.f32 %v1300, %v1411
      %1413 = vmatmul.bf16.gmra.mxu0 %v655
      %v1414 = vpop.f32.mrf.mxu0
      %v1415 = vadd.f32 %v1300, %v1414
      %v1416 = vpop.f32.mrf.mxu0
      %v1417 = vadd.f32 %v1300, %v1416
      %1418 = vmatmul.bf16.gmra.mxu0 %v658
      %v1419 = vpop.f32.mrf.mxu0
      %v1420 = vadd.f32 %v1300, %v1419
      %v1421 = vpop.f32.mrf.mxu0
      %v1422 = vadd.f32 %v1300, %v1421
      %1423 = vmatmul.bf16.gmra.mxu0 %v661
      %v1424 = vpop.f32.mrf.mxu0
      %v1425 = vadd.f32 %v1300, %v1424
      %v1426 = vpop.f32.mrf.mxu0
      %v1427 = vadd.f32 %v1300, %v1426
      %1428 = vmatmul.bf16.gmra.mxu0 %v664
      %v1429 = vpop.f32.mrf.mxu0
      %v1430 = vadd.f32 %v1300, %v1429
      %v1431 = vpop.f32.mrf.mxu0
      %v1432 = vadd.f32 %v1300, %v1431
      %1433 = vmatmul.bf16.gmra.mxu0 %v667
      %v1434 = vpop.f32.mrf.mxu0
      %v1435 = vadd.f32 %v1300, %v1434
      %v1436 = vpop.f32.mrf.mxu0
      %v1437 = vadd.f32 %v1300, %v1436
      %1438 = vmatmul.bf16.gmra.mxu0 %v670
      %v1439 = vpop.f32.mrf.mxu0
      %v1440 = vadd.f32 %v1300, %v1439
      %v1441 = vpop.f32.mrf.mxu0
      %v1442 = vadd.f32 %v1300, %v1441
      %1443 = vmatmul.bf16.gmra.mxu0 %v673
      %v1444 = vpop.f32.mrf.mxu0
      %v1445 = vadd.f32 %v1300, %v1444
      %v1446 = vpop.f32.mrf.mxu0
      %v1447 = vadd.f32 %v1300, %v1446
      %1448 = vmatmul.bf16.gmra.mxu0 %v676
      %v1449 = vpop.f32.mrf.mxu0
      %v1450 = vadd.f32 %v1300, %v1449
      %v1451 = vpop.f32.mrf.mxu0
      %v1452 = vadd.f32 %v1300, %v1451
      %1453 = vmatmul.bf16.gmra.mxu0 %v679
      %v1454 = vpop.f32.mrf.mxu0
      %v1455 = vadd.f32 %v1300, %v1454
      %v1456 = vpop.f32.mrf.mxu0
      %v1457 = vadd.f32 %v1300, %v1456
      %1458 = vmatmul.bf16.gmra.mxu0 %v682
      %v1459 = vpop.f32.mrf.mxu0
      %v1460 = vadd.f32 %v1300, %v1459
      %v1461 = vpop.f32.mrf.mxu0
      %v1462 = vadd.f32 %v1300, %v1461
      %1463 = vmatmul.bf16.gmra.mxu0 %v685
      %v1464 = vpop.f32.mrf.mxu0
      %v1465 = vadd.f32 %v1300, %v1464
      %v1466 = vpop.f32.mrf.mxu0
      %v1467 = vadd.f32 %v1300, %v1466
      %1468 = vmatmul.bf16.gmra.mxu0 %v688
      %v1469 = vpop.f32.mrf.mxu0
      %v1470 = vadd.f32 %v1300, %v1469
      %v1471 = vpop.f32.mrf.mxu0
      %v1472 = vadd.f32 %v1300, %v1471
      %1473 = vdwg.mxu0
      %v1474 = vpack.c.bf16 %v1315, %v1315
      %v1475 = vpack.c.bf16 %v1317, %v1317
      %v1476 = vpack.c.bf16 %v1320, %v1320
      %v1477 = vpack.c.bf16 %v1322, %v1322
      %v1478 = vpack.c.bf16 %v1325, %v1325
      %v1479 = vpack.c.bf16 %v1327, %v1327
      %v1480 = vpack.c.bf16 %v1330, %v1330
      %v1481 = vpack.c.bf16 %v1332, %v1332
      %v1482 = vpack.c.bf16 %v1335, %v1335
      %v1483 = vpack.c.bf16 %v1337, %v1337
      %v1484 = vpack.c.bf16 %v1340, %v1340
      %v1485 = vpack.c.bf16 %v1342, %v1342
      %v1486 = vpack.c.bf16 %v1345, %v1345
      %v1487 = vpack.c.bf16 %v1347, %v1347
      %v1488 = vpack.c.bf16 %v1350, %v1350
      %v1489 = vpack.c.bf16 %v1352, %v1352
      %v1490 = vpack.c.bf16 %v1355, %v1355
      %v1491 = vpack.c.bf16 %v1357, %v1357
      %v1492 = vpack.c.bf16 %v1360, %v1360
      %v1493 = vpack.c.bf16 %v1362, %v1362
      %v1494 = vpack.c.bf16 %v1365, %v1365
      %v1495 = vpack.c.bf16 %v1367, %v1367
      %v1496 = vpack.c.bf16 %v1370, %v1370
      %v1497 = vpack.c.bf16 %v1372, %v1372
      %v1498 = vpack.c.bf16 %v1375, %v1375
      %v1499 = vpack.c.bf16 %v1377, %v1377
      %v1500 = vpack.c.bf16 %v1380, %v1380
      %v1501 = vpack.c.bf16 %v1382, %v1382
      %v1502 = vpack.c.bf16 %v1385, %v1385
      %v1503 = vpack.c.bf16 %v1387, %v1387
      %v1504 = vpack.c.bf16 %v1390, %v1390
      %v1505 = vpack.c.bf16 %v1392, %v1392
      %v1506 = vpack.c.bf16 %v1395, %v1395
      %v1507 = vpack.c.bf16 %v1397, %v1397
      %v1508 = vpack.c.bf16 %v1400, %v1400
      %v1509 = vpack.c.bf16 %v1402, %v1402
      %v1510 = vpack.c.bf16 %v1405, %v1405
      %v1511 = vpack.c.bf16 %v1407, %v1407
      %v1512 = vpack.c.bf16 %v1410, %v1410
      %v1513 = vpack.c.bf16 %v1412, %v1412
      %v1514 = vpack.c.bf16 %v1415, %v1415
      %v1515 = vpack.c.bf16 %v1417, %v1417
      %v1516 = vpack.c.bf16 %v1420, %v1420
      %v1517 = vpack.c.bf16 %v1422, %v1422
      %v1518 = vpack.c.bf16 %v1425, %v1425
      %v1519 = vpack.c.bf16 %v1427, %v1427
      %v1520 = vpack.c.bf16 %v1430, %v1430
      %v1521 = vpack.c.bf16 %v1432, %v1432
      %v1522 = vpack.c.bf16 %v1435, %v1435
      %v1523 = vpack.c.bf16 %v1437, %v1437
      %v1524 = vpack.c.bf16 %v1440, %v1440
      %v1525 = vpack.c.bf16 %v1442, %v1442
      %v1526 = vpack.c.bf16 %v1445, %v1445
      %v1527 = vpack.c.bf16 %v1447, %v1447
      %v1528 = vpack.c.bf16 %v1450, %v1450
      %v1529 = vpack.c.bf16 %v1452, %v1452
      %v1530 = vpack.c.bf16 %v1455, %v1455
      %v1531 = vpack.c.bf16 %v1457, %v1457
      %v1532 = vpack.c.bf16 %v1460, %v1460
      %v1533 = vpack.c.bf16 %v1462, %v1462
      %v1534 = vpack.c.bf16 %v1465, %v1465
      %v1535 = vpack.c.bf16 %v1467, %v1467
      %v1536 = vpack.c.bf16 %v1470, %v1470
      %v1537 = vpack.c.bf16 %v1472, %v1472
      %1538 = vst.msk [vmem:[%s361] sm:$0xf] %vm927, %v1474
      %1539 = vst.msk [vmem:[%s361 + $0x4] sm:$0xf] %vm927, %v1475
      %1540 = vst.msk [vmem:[%s361 + $0x8] sm:$0xf] %vm927, %v1476
      %1541 = vst.msk [vmem:[%s361 + $0xc] sm:$0xf] %vm927, %v1477
      %1542 = vst.msk [vmem:[%s361 + $0x10] sm:$0xf] %vm927, %v1478
      %1543 = vst.msk [vmem:[%s361 + $0x14] sm:$0xf] %vm927, %v1479
      %1544 = vst.msk [vmem:[%s361 + $0x18] sm:$0xf] %vm927, %v1480
      %1545 = vst.msk [vmem:[%s361 + $0x1c] sm:$0xf] %vm927, %v1481
      %1546 = vst.msk [vmem:[%s361 + $0x20] sm:$0xf] %vm927, %v1482
      %1547 = vst.msk [vmem:[%s361 + $0x24] sm:$0xf] %vm927, %v1483
      %1548 = vst.msk [vmem:[%s361 + $0x28] sm:$0xf] %vm927, %v1484
      %1549 = vst.msk [vmem:[%s361 + $0x2c] sm:$0xf] %vm927, %v1485
      %1550 = vst.msk [vmem:[%s361 + $0x30] sm:$0xf] %vm927, %v1486
      %1551 = vst.msk [vmem:[%s361 + $0x34] sm:$0xf] %vm927, %v1487
      %1552 = vst.msk [vmem:[%s361 + $0x38] sm:$0xf] %vm927, %v1488
      %1553 = vst.msk [vmem:[%s361 + $0x3c] sm:$0xf] %vm927, %v1489
      %1554 = vst.msk [vmem:[%s361 + $0x40] sm:$0xf] %vm927, %v1490
      %1555 = vst.msk [vmem:[%s361 + $0x44] sm:$0xf] %vm927, %v1491
      %1556 = vst.msk [vmem:[%s361 + $0x48] sm:$0xf] %vm927, %v1492
      %1557 = vst.msk [vmem:[%s361 + $0x4c] sm:$0xf] %vm927, %v1493
      %1558 = vst.msk [vmem:[%s361 + $0x50] sm:$0xf] %vm927, %v1494
      %1559 = vst.msk [vmem:[%s361 + $0x54] sm:$0xf] %vm927, %v1495
      %1560 = vst.msk [vmem:[%s361 + $0x58] sm:$0xf] %vm927, %v1496
      %1561 = vst.msk [vmem:[%s361 + $0x5c] sm:$0xf] %vm927, %v1497
      %1562 = vst.msk [vmem:[%s361 + $0x60] sm:$0xf] %vm927, %v1498
      %1563 = vst.msk [vmem:[%s361 + $0x64] sm:$0xf] %vm927, %v1499
      %1564 = vst.msk [vmem:[%s361 + $0x68] sm:$0xf] %vm927, %v1500
      %1565 = vst.msk [vmem:[%s361 + $0x6c] sm:$0xf] %vm927, %v1501
      %1566 = vst.msk [vmem:[%s361 + $0x70] sm:$0xf] %vm927, %v1502
      %1567 = vst.msk [vmem:[%s361 + $0x74] sm:$0xf] %vm927, %v1503
      %1568 = vst.msk [vmem:[%s361 + $0x78] sm:$0xf] %vm927, %v1504
      %1569 = vst.msk [vmem:[%s361 + $0x7c] sm:$0xf] %vm927, %v1505
      %1570 = vst.msk [vmem:[%s361 + $0x80] sm:$0xf] %vm927, %v1506
      %1571 = vst.msk [vmem:[%s361 + $0x84] sm:$0xf] %vm927, %v1507
      %1572 = vst.msk [vmem:[%s361 + $0x88] sm:$0xf] %vm927, %v1508
      %1573 = vst.msk [vmem:[%s361 + $0x8c] sm:$0xf] %vm927, %v1509
      %1574 = vst.msk [vmem:[%s361 + $0x90] sm:$0xf] %vm927, %v1510
      %1575 = vst.msk [vmem:[%s361 + $0x94] sm:$0xf] %vm927, %v1511
      %1576 = vst.msk [vmem:[%s361 + $0x98] sm:$0xf] %vm927, %v1512
      %1577 = vst.msk [vmem:[%s361 + $0x9c] sm:$0xf] %vm927, %v1513
      %1578 = vst.msk [vmem:[%s361 + $0xa0] sm:$0xf] %vm927, %v1514
      %1579 = vst.msk [vmem:[%s361 + $0xa4] sm:$0xf] %vm927, %v1515
      %1580 = vst.msk [vmem:[%s361 + $0xa8] sm:$0xf] %vm927, %v1516
      %1581 = vst.msk [vmem:[%s361 + $0xac] sm:$0xf] %vm927, %v1517
      %1582 = vst.msk [vmem:[%s361 + $0xb0] sm:$0xf] %vm927, %v1518
      %1583 = vst.msk [vmem:[%s361 + $0xb4] sm:$0xf] %vm927, %v1519
      %1584 = vst.msk [vmem:[%s361 + $0xb8] sm:$0xf] %vm927, %v1520
      %1585 = vst.msk [vmem:[%s361 + $0xbc] sm:$0xf] %vm927, %v1521
      %1586 = vst.msk [vmem:[%s361 + $0xc0] sm:$0xf] %vm927, %v1522
      %1587 = vst.msk [vmem:[%s361 + $0xc4] sm:$0xf] %vm927, %v1523
      %1588 = vst.msk [vmem:[%s361 + $0xc8] sm:$0xf] %vm927, %v1524
      %1589 = vst.msk [vmem:[%s361 + $0xcc] sm:$0xf] %vm927, %v1525
      %1590 = vst.msk [vmem:[%s361 + $0xd0] sm:$0xf] %vm927, %v1526
      %1591 = vst.msk [vmem:[%s361 + $0xd4] sm:$0xf] %vm927, %v1527
      %1592 = vst.msk [vmem:[%s361 + $0xd8] sm:$0xf] %vm927, %v1528
      %1593 = vst.msk [vmem:[%s361 + $0xdc] sm:$0xf] %vm927, %v1529
      %1594 = vst.msk [vmem:[%s361 + $0xe0] sm:$0xf] %vm927, %v1530
      %1595 = vst.msk [vmem:[%s361 + $0xe4] sm:$0xf] %vm927, %v1531
      %1596 = vst.msk [vmem:[%s361 + $0xe8] sm:$0xf] %vm927, %v1532
      %1597 = vst.msk [vmem:[%s361 + $0xec] sm:$0xf] %vm927, %v1533
      %1598 = vst.msk [vmem:[%s361 + $0xf0] sm:$0xf] %vm927, %v1534
      %1599 = vst.msk [vmem:[%s361 + $0xf4] sm:$0xf] %vm927, %v1535
      %1600 = vst.msk [vmem:[%s361 + $0xf8] sm:$0xf] %vm927, %v1536
      %1601 = vst.msk [vmem:[%s361 + $0xfc] sm:$0xf] %vm927, %v1537
      %s1602 = smul.u32 64, %s21
      %p1603 = scmp.lt.s32.totalorder %s1602, 127
      %s1604 = scalar_select %p1603, %s1602, 127
      %s1605 = smul.addr %s1604, 4
      %s1606 = scalar_lea.vmem %s7, %s1605
      %s1607 = smul.u32 64, %s21
      %p1608 = scmp.lt.s32.totalorder %s1607, 127
      %s1609 = scalar_select %p1608, %s1607, 127
      %s1610 = smul.addr %s1609, 4
      %s1611 = scalar_lea.vmem %s8, %s1610
      %s1612 = smul.u32 64, %s21
      %p1613 = scmp.lt.s32.totalorder %s1612, 127
      %s1614 = scalar_select %p1613, %s1612, 127
      %s1615 = smul.addr %s1614, 4
      %s1616 = scalar_lea.vmem %s9, %s1615
      // Predicated region
      $region49: #{tpu_custom_call.1} parent=47 // pred_check
        %p1617 = pneg %p191
      $region50: #{tpu_custom_call.1} parent=47 // pred_check_branch
        %1619 = sbr.rel (%p1617) target = $region52
      $region51: #{tpu_custom_call.1} parent=47 // pred_region
        %s1620 = smul.u32 64, %s21
      $region52: #{tpu_custom_call.1} parent=47 // pred_fallthru
        _
      // Predicated region
      $region53: #{tpu_custom_call.1} parent=47 // pred_check
        %p1621 = pneg %p217
      $region54: #{tpu_custom_call.1} parent=47 // pred_check_branch
        %1623 = sbr.rel (%p1621) target = $region56
      $region55: #{tpu_custom_call.1} parent=47 // pred_region
        %s1624 = smul.u32 64, %s21
      $region56: #{tpu_custom_call.1} parent=47 // pred_fallthru
        _
      // Predicated region
      $region57: #{tpu_custom_call.1} parent=47 // pred_check
        %p1625 = pneg %p243
      $region58: #{tpu_custom_call.1} parent=47 // pred_check_branch
        %1627 = sbr.rel (%p1625) target = $region60
      $region59: #{tpu_custom_call.1} parent=47 // pred_region
        %s1628 = smul.u32 64, %s21
      $region60: #{tpu_custom_call.1} parent=47 // pred_fallthru
        _
    $region48: #{tpu_custom_call.1} parent=5 // pred_fallthru
      _
    %p1629 = scmp.le.s32.totalorder 2, %s16
    // Predicated region
    $region61: #{tpu_custom_call.1} parent=5 // pred_check
      %p1630 = pneg %p1629
    $region62: #{tpu_custom_call.1} parent=5 // pred_check_branch
      %1632 = sbr.rel (%p1630) target = $region64
    $region63: #{tpu_custom_call.1} parent=5 // pred_region
      %s1633 = ssub.s32 %s16, 2
      // Predicated region
      $region65: #{tpu_custom_call.1} parent=63 // pred_check
        %p1634 = pneg %p197
      $region66: #{tpu_custom_call.1} parent=63 // pred_check_branch
        %1636 = sbr.rel (%p1634) target = $region68
      $region67: #{tpu_custom_call.1} parent=63 // pred_region
        %s1637 = smul.u32 64, %s22
        %p1638 = scmp.lt.s32.totalorder %s1637, 127
        %s1639 = scalar_select %p1638, %s1637, 127
        %s1640 = smul.addr %s1639, 4
        %s1641 = scalar_lea.vmem %s7, %s1640
      $region68: #{tpu_custom_call.1} parent=63 // pred_fallthru
        _
      // Predicated region
      $region69: #{tpu_custom_call.1} parent=63 // pred_check
        %p1642 = pneg %p223
      $region70: #{tpu_custom_call.1} parent=63 // pred_check_branch
        %1644 = sbr.rel (%p1642) target = $region72
      $region71: #{tpu_custom_call.1} parent=63 // pred_region
        %s1645 = smul.u32 64, %s22
        %p1646 = scmp.lt.s32.totalorder %s1645, 127
        %s1647 = scalar_select %p1646, %s1645, 127
        %s1648 = smul.addr %s1647, 4
        %s1649 = scalar_lea.vmem %s8, %s1648
      $region72: #{tpu_custom_call.1} parent=63 // pred_fallthru
        _
      // Predicated region
      $region73: #{tpu_custom_call.1} parent=63 // pred_check
        %p1650 = pneg %p249
      $region74: #{tpu_custom_call.1} parent=63 // pred_check_branch
        %1652 = sbr.rel (%p1650) target = $region76
      $region75: #{tpu_custom_call.1} parent=63 // pred_region
        %s1653 = smul.u32 64, %s22
        %p1654 = scmp.lt.s32.totalorder %s1653, 127
        %s1655 = scalar_select %p1654, %s1653, 127
        %s1656 = smul.addr %s1655, 4
        %s1657 = scalar_lea.vmem %s9, %s1656
      $region76: #{tpu_custom_call.1} parent=63 // pred_fallthru
        _
    $region64: #{tpu_custom_call.1} parent=5 // pred_fallthru
      _
  $region6: #{tpu_custom_call.1} parent=0 // loop_footer
    %s20 = sadd.s32 1, %s16
  $region7: #{tpu_custom_call.1} parent=0 // loop_footer_branch
    %15 = sbr.rel target = $region3
  $region8: #{tpu_custom_call.1} parent=0 // loop_exit
    _

</llo_original>
